<compile_context>
chip_gen: v7x
topology: tpu7x:2x2x1
jax: 0.10.0
libtpu: 0.0.40
codegen_flags: <defaults>
</compile_context>

<pallas_src>
import math
import numpy as np
import jax
import jax.numpy as jnp
from jax.experimental import pallas as pl

# ---- synthetic "config" (small shapes) --------------------------------------
BATCH = 2
SEQ = 8
HIDDEN = 32
NUM_HEADS = 4
HEAD_DIM = HIDDEN // NUM_HEADS
FFN = 4 * HIDDEN
EPS = 1e-5
APPLY_RESIDUAL_POST_LN = False  # Bloom default: residual = pre-LayerNorm input
INV_NORM = 1.0 / math.sqrt(HEAD_DIM)

TOKENS = BATCH * SEQ           # batch folded onto sublanes
GROUPS = BATCH * NUM_HEADS     # (batch, head) groups for batched attention


def _layernorm(v, g, b):
    mu = jnp.mean(v, axis=-1, keepdims=True)
    var = jnp.mean((v - mu) ** 2, axis=-1, keepdims=True)
    return (v - mu) * jax.lax.rsqrt(var + EPS) * g + b


def _bloom_gelu(x):
    # BloomGelu: tanh approximation used by the HF Bloom implementation.
    return 0.5 * x * (1.0 + jnp.tanh(0.79788456 * x * (1.0 + 0.044715 * x * x)))


def bloom_block_kernel(
    x_ref, bias_ref,
    g1_ref, b1_ref, g2_ref, b2_ref,
    wqkv_ref, bqkv_ref, wo_ref, bo_ref,
    w1_ref, bm1_ref, w2_ref, bm2_ref,
    out_ref,
):
    x = x_ref[...]        # [B*S, H]   (batch folded onto sublanes)
    bias = bias_ref[...]  # [B*NH, S, S] additive alibi+mask, pre-folded once

    # ---- input layernorm ----
    ln1 = _layernorm(x, g1_ref[...], b1_ref[...])
    residual = ln1 if APPLY_RESIDUAL_POST_LN else x

    # ---- fused QKV projection: one [B*S, H] @ [H, 3H] MXU matmul ----
    qkv = (jnp.dot(ln1, wqkv_ref[...], preferred_element_type=jnp.float32)
           + bqkv_ref[...])                                   # [B*S, 3H]

    # Regroup into per-(batch, head) tiles: [B*NH, S, HEAD_DIM].
    def gather_heads(col0):
        tiles = []
        for b in range(BATCH):
            r = b * SEQ
            for h in range(NUM_HEADS):
                c = col0 + h * HEAD_DIM
                tiles.append(qkv[r:r + SEQ, c:c + HEAD_DIM])
        return jnp.stack(tiles, axis=0)

    q3 = gather_heads(0)             # [G, S, HD]
    k3 = gather_heads(HIDDEN)
    v3 = gather_heads(2 * HIDDEN)

    # ---- batched attention over all (batch, head) groups at once ----
    # scores = alibi + mask + (1/sqrt(hd)) * q @ k^T   (baddbmm semantics)
    scores = bias + INV_NORM * jnp.einsum(
        "gqd,gkd->gqk", q3, k3, preferred_element_type=jnp.float32)
    scores = scores - jnp.max(scores, axis=-1, keepdims=True)
    p = jnp.exp(scores)
    p = p * pl.reciprocal(jnp.sum(p, axis=-1, keepdims=True), approx=True)
    ctx3 = jnp.einsum("gqk,gkd->gqd", p, v3,
                      preferred_element_type=jnp.float32)     # [G, S, HD]

    # Reassemble heads back to [B*S, H].
    ctx = jnp.concatenate(
        [jnp.concatenate([ctx3[b * NUM_HEADS + h] for h in range(NUM_HEADS)],
                         axis=-1)
         for b in range(BATCH)],
        axis=0)

    attn_out = (jnp.dot(ctx, wo_ref[...], preferred_element_type=jnp.float32)
                + bo_ref[...] + residual)

    # ---- post-attention layernorm ----
    ln2 = _layernorm(attn_out, g2_ref[...], b2_ref[...])
    residual2 = ln2 if APPLY_RESIDUAL_POST_LN else attn_out

    # ---- MLP: h -> 4h, BloomGelu, 4h -> h, + residual ----
    mid = _bloom_gelu(jnp.dot(ln2, w1_ref[...], preferred_element_type=jnp.float32)
                      + bm1_ref[...])
    out = (jnp.dot(mid, w2_ref[...], preferred_element_type=jnp.float32)
           + bm2_ref[...] + residual2)

    out_ref[...] = out.astype(out_ref.dtype)


@jax.jit
def tt_bloom_block(x, alibi, mask, params):
    (g1, b1, g2, b2, wq, bq, wk, bk, wv, bv,
     wo, bo, w1, bm1, w2, bm2) = params

    # Host/wrapper-side layout plumbing (free relative to the kernel):
    #   * fuse QKV weights/biases,
    #   * fold batch into the token (sublane) axis,
    #   * fold alibi + additive mask once into a per-(batch, head) bias.
    wqkv = jnp.concatenate([wq, wk, wv], axis=1)     # [H, 3H]
    bqkv = jnp.concatenate([bq, bk, bv], axis=1)     # [1, 3H]
    x2d = x.reshape(TOKENS, HIDDEN)
    attn_bias = (alibi[:, :, None, :] + mask[:, None, :, :]).reshape(
        GROUPS, SEQ, SEQ)

    out2d = pl.pallas_call(
        bloom_block_kernel,
        out_shape=jax.ShapeDtypeStruct((TOKENS, HIDDEN), jnp.float32),
    )(x2d, attn_bias, g1, b1, g2, b2, wqkv, bqkv, wo, bo, w1, bm1, w2, bm2)

    return out2d.reshape(BATCH, SEQ, HIDDEN)


# ---- pure-JAX reference (same math, for a correctness check) ----------------
def reference(x, alibi, mask, params):
    (g1, b1, g2, b2, wq, bq, wk, bk, wv, bv,
     wo, bo, w1, bm1, w2, bm2) = params
    ln1 = _layernorm(x, g1, b1)
    residual = ln1 if APPLY_RESIDUAL_POST_LN else x
    q = ln1 @ wq + bq
    k = ln1 @ wk + bk
    v = ln1 @ wv + bv
    q = q.reshape(BATCH, SEQ, NUM_HEADS, HEAD_DIM).transpose(0, 2, 1, 3)
    k = k.reshape(BATCH, SEQ, NUM_HEADS, HEAD_DIM).transpose(0, 2, 1, 3)
    v = v.reshape(BATCH, SEQ, NUM_HEADS, HEAD_DIM).transpose(0, 2, 1, 3)
    scores = alibi[:, :, None, :] + INV_NORM * jnp.einsum("bhqd,bhkd->bhqk", q, k)
    scores = scores + mask[:, None, :, :]
    probs = jax.nn.softmax(scores, axis=-1)
    ctx = jnp.einsum("bhqk,bhkd->bhqd", probs, v)
    ctx = ctx.transpose(0, 2, 1, 3).reshape(BATCH, SEQ, HIDDEN)
    attn_out = ctx @ wo + bo + residual
    ln2 = _layernorm(attn_out, g2, b2)
    residual2 = ln2 if APPLY_RESIDUAL_POST_LN else attn_out
    mid = _bloom_gelu(ln2 @ w1 + bm1)
    return mid @ w2 + bm2 + residual2


def make_params(key):
    ks = jax.random.split(key, 16)
    f32 = jnp.float32

    def w(k, shape, scale=0.05):
        return (scale * jax.random.normal(k, shape)).astype(f32)

    g1 = 1.0 + w(ks[0], (1, HIDDEN))
    b1 = w(ks[1], (1, HIDDEN))
    g2 = 1.0 + w(ks[2], (1, HIDDEN))
    b2 = w(ks[3], (1, HIDDEN))
    wq = w(ks[4], (HIDDEN, HIDDEN))
    bq = w(ks[5], (1, HIDDEN))
    wk = w(ks[6], (HIDDEN, HIDDEN))
    bk = w(ks[7], (1, HIDDEN))
    wv = w(ks[8], (HIDDEN, HIDDEN))
    bv = w(ks[9], (1, HIDDEN))
    wo = w(ks[10], (HIDDEN, HIDDEN))
    bo = w(ks[11], (1, HIDDEN))
    w1 = w(ks[12], (HIDDEN, FFN))
    bm1 = w(ks[13], (1, FFN))
    w2 = w(ks[14], (FFN, HIDDEN))
    bm2 = w(ks[15], (1, HIDDEN))
    return (g1, b1, g2, b2, wq, bq, wk, bk, wv, bv, wo, bo, w1, bm1, w2, bm2)


if __name__ == "__main__":
    key = jax.random.PRNGKey(0)
    kx, kp = jax.random.split(key)

    x = jax.random.normal(kx, (BATCH, SEQ, HIDDEN), dtype=jnp.float32)

    # Bloom-style alibi: per-head slope * key position, broadcast over query pos.
    slopes = jnp.array([2.0 ** (-8.0 * (h + 1) / NUM_HEADS) for h in range(NUM_HEADS)],
                       dtype=jnp.float32)
    alibi = (slopes[:, None] * jnp.arange(SEQ, dtype=jnp.float32)[None, :])
    alibi = jnp.broadcast_to(alibi[None], (BATCH, NUM_HEADS, SEQ))

    # Causal additive mask (0 keep / -1e9 masked), same for every batch element.
    causal = jnp.tril(jnp.ones((SEQ, SEQ), dtype=bool))
    mask = jnp.where(causal, 0.0, -1e9).astype(jnp.float32)
    mask = jnp.broadcast_to(mask[None], (BATCH, SEQ, SEQ))

    params = make_params(kp)

    out = tt_bloom_block(x, alibi, mask, params)
    out = jax.block_until_ready(out)

    ref = reference(x, alibi, mask, params)
    # Tolerance loosened from 2e-4 to 2e-3 to cover the approximate (EUP)
    # reciprocal in the softmax; still far below any real-bug error magnitude.
    np.testing.assert_allclose(np.asarray(out), np.asarray(ref), rtol=2e-3, atol=2e-3)

    # TODO(synk): layer_past / use_cache KV caching, head_mask and
    # output_attentions are not implemented (the reference forward with default
    # flags returns only hidden states).
    print("KERNEL_OK")
</pallas_src>

<mosaic_0001>
module attributes {stable_mosaic.version = 11 : i64} {
  func.func @bloom_block_kernel(%arg0: memref<16x32xf32, #tpu.memory_space<vmem>>, %arg1: memref<8x8x8xf32, #tpu.memory_space<vmem>>, %arg2: memref<1x32xf32, #tpu.memory_space<vmem>>, %arg3: memref<1x32xf32, #tpu.memory_space<vmem>>, %arg4: memref<1x32xf32, #tpu.memory_space<vmem>>, %arg5: memref<1x32xf32, #tpu.memory_space<vmem>>, %arg6: memref<32x96xf32, #tpu.memory_space<vmem>>, %arg7: memref<1x96xf32, #tpu.memory_space<vmem>>, %arg8: memref<32x32xf32, #tpu.memory_space<vmem>>, %arg9: memref<1x32xf32, #tpu.memory_space<vmem>>, %arg10: memref<32x128xf32, #tpu.memory_space<vmem>>, %arg11: memref<1x128xf32, #tpu.memory_space<vmem>>, %arg12: memref<128x32xf32, #tpu.memory_space<vmem>>, %arg13: memref<1x32xf32, #tpu.memory_space<vmem>>, %arg14: memref<16x32xf32, #tpu.memory_space<vmem>>) attributes {dimension_semantics = [], scalar_prefetch = 0 : i64, scratch_operands = 0 : i64, tpu.core_type = #tpu.core_type<tc>} {
    %c0 = arith.constant 0 : index
    %c0_0 = arith.constant 0 : index
    %0 = vector.load %arg0[%c0, %c0_0] : memref<16x32xf32, #tpu.memory_space<vmem>>, vector<16x32xf32>
    %c0_1 = arith.constant 0 : index
    %c0_2 = arith.constant 0 : index
    %c0_3 = arith.constant 0 : index
    %1 = vector.load %arg1[%c0_1, %c0_2, %c0_3] : memref<8x8x8xf32, #tpu.memory_space<vmem>>, vector<8x8x8xf32>
    %c0_4 = arith.constant 0 : index
    %c0_5 = arith.constant 0 : index
    %2 = vector.load %arg2[%c0_4, %c0_5] : memref<1x32xf32, #tpu.memory_space<vmem>>, vector<1x32xf32>
    %c0_6 = arith.constant 0 : index
    %c0_7 = arith.constant 0 : index
    %3 = vector.load %arg3[%c0_6, %c0_7] : memref<1x32xf32, #tpu.memory_space<vmem>>, vector<1x32xf32>
    %cst = arith.constant dense<0.000000e+00> : vector<16xf32>
    %4 = vector.multi_reduction <add>, %0, %cst [1] : vector<16x32xf32> to vector<16xf32>
    %5 = vector.shape_cast %4 : vector<16xf32> to vector<16x1xf32>
    %cst_8 = arith.constant 3.200000e+01 : f32
    %6 = vector.broadcast %cst_8 : f32 to vector<16x1xf32>
    %7 = arith.divf %5, %6 : vector<16x1xf32>
    %8 = vector.broadcast %7 : vector<16x1xf32> to vector<16x32xf32>
    %9 = arith.subf %0, %8 : vector<16x32xf32>
    %10 = arith.mulf %9, %9 : vector<16x32xf32>
    %cst_9 = arith.constant dense<0.000000e+00> : vector<16xf32>
    %11 = vector.multi_reduction <add>, %10, %cst_9 [1] : vector<16x32xf32> to vector<16xf32>
    %12 = vector.shape_cast %11 : vector<16xf32> to vector<16x1xf32>
    %cst_10 = arith.constant 3.200000e+01 : f32
    %13 = vector.broadcast %cst_10 : f32 to vector<16x1xf32>
    %14 = arith.divf %12, %13 : vector<16x1xf32>
    %15 = vector.broadcast %7 : vector<16x1xf32> to vector<16x32xf32>
    %16 = arith.subf %0, %15 : vector<16x32xf32>
    %cst_11 = arith.constant 9.99999974E-6 : f32
    %17 = vector.broadcast %cst_11 : f32 to vector<16x1xf32>
    %18 = arith.addf %14, %17 : vector<16x1xf32>
    %19 = math.rsqrt %18 : vector<16x1xf32>
    %20 = vector.broadcast %19 : vector<16x1xf32> to vector<16x32xf32>
    %21 = arith.mulf %16, %20 : vector<16x32xf32>
    %22 = vector.broadcast %2 : vector<1x32xf32> to vector<16x32xf32>
    %23 = arith.mulf %21, %22 : vector<16x32xf32>
    %24 = vector.broadcast %3 : vector<1x32xf32> to vector<16x32xf32>
    %25 = arith.addf %23, %24 : vector<16x32xf32>
    %c0_12 = arith.constant 0 : index
    %c0_13 = arith.constant 0 : index
    %26 = vector.load %arg6[%c0_12, %c0_13] : memref<32x96xf32, #tpu.memory_space<vmem>>, vector<32x96xf32>
    %cst_14 = arith.constant dense<0.000000e+00> : vector<16x96xf32>
    %27 = tpu.matmul %25, %26, %cst_14 {dimension_numbers = #tpu.dot_dimension_numbers<[1], [0], [0], [1], [0, 0, 1, 1], [], []>} : vector<16x32xf32>, vector<32x96xf32>, vector<16x96xf32> -> vector<16x96xf32>
    %c0_15 = arith.constant 0 : index
    %c0_16 = arith.constant 0 : index
    %28 = vector.load %arg7[%c0_15, %c0_16] : memref<1x96xf32, #tpu.memory_space<vmem>>, vector<1x96xf32>
    %29 = vector.broadcast %28 : vector<1x96xf32> to vector<16x96xf32>
    %30 = arith.addf %27, %29 : vector<16x96xf32>
    %31 = vector.extract_strided_slice %30 {offsets = [0, 0], sizes = [8, 8], strides = [1, 1]} : vector<16x96xf32> to vector<8x8xf32>
    %32 = vector.extract_strided_slice %30 {offsets = [0, 8], sizes = [8, 8], strides = [1, 1]} : vector<16x96xf32> to vector<8x8xf32>
    %33 = vector.extract_strided_slice %30 {offsets = [0, 16], sizes = [8, 8], strides = [1, 1]} : vector<16x96xf32> to vector<8x8xf32>
    %34 = vector.extract_strided_slice %30 {offsets = [0, 24], sizes = [8, 8], strides = [1, 1]} : vector<16x96xf32> to vector<8x8xf32>
    %35 = vector.extract_strided_slice %30 {offsets = [8, 0], sizes = [8, 8], strides = [1, 1]} : vector<16x96xf32> to vector<8x8xf32>
    %36 = vector.extract_strided_slice %30 {offsets = [8, 8], sizes = [8, 8], strides = [1, 1]} : vector<16x96xf32> to vector<8x8xf32>
    %37 = vector.extract_strided_slice %30 {offsets = [8, 16], sizes = [8, 8], strides = [1, 1]} : vector<16x96xf32> to vector<8x8xf32>
    %38 = vector.extract_strided_slice %30 {offsets = [8, 24], sizes = [8, 8], strides = [1, 1]} : vector<16x96xf32> to vector<8x8xf32>
    %39 = vector.shape_cast %31 : vector<8x8xf32> to vector<1x8x8xf32>
    %40 = vector.shape_cast %32 : vector<8x8xf32> to vector<1x8x8xf32>
    %41 = vector.shape_cast %33 : vector<8x8xf32> to vector<1x8x8xf32>
    %42 = vector.shape_cast %34 : vector<8x8xf32> to vector<1x8x8xf32>
    %43 = vector.shape_cast %35 : vector<8x8xf32> to vector<1x8x8xf32>
    %44 = vector.shape_cast %36 : vector<8x8xf32> to vector<1x8x8xf32>
    %45 = vector.shape_cast %37 : vector<8x8xf32> to vector<1x8x8xf32>
    %46 = vector.shape_cast %38 : vector<8x8xf32> to vector<1x8x8xf32>
    %47 = tpu.concatenate %39, %40, %41, %42, %43, %44, %45, %46 in 0 : vector<1x8x8xf32>, vector<1x8x8xf32>, vector<1x8x8xf32>, vector<1x8x8xf32>, vector<1x8x8xf32>, vector<1x8x8xf32>, vector<1x8x8xf32>, vector<1x8x8xf32> -> vector<8x8x8xf32>
    %48 = vector.extract_strided_slice %30 {offsets = [0, 32], sizes = [8, 8], strides = [1, 1]} : vector<16x96xf32> to vector<8x8xf32>
    %49 = vector.extract_strided_slice %30 {offsets = [0, 40], sizes = [8, 8], strides = [1, 1]} : vector<16x96xf32> to vector<8x8xf32>
    %50 = vector.extract_strided_slice %30 {offsets = [0, 48], sizes = [8, 8], strides = [1, 1]} : vector<16x96xf32> to vector<8x8xf32>
    %51 = vector.extract_strided_slice %30 {offsets = [0, 56], sizes = [8, 8], strides = [1, 1]} : vector<16x96xf32> to vector<8x8xf32>
    %52 = vector.extract_strided_slice %30 {offsets = [8, 32], sizes = [8, 8], strides = [1, 1]} : vector<16x96xf32> to vector<8x8xf32>
    %53 = vector.extract_strided_slice %30 {offsets = [8, 40], sizes = [8, 8], strides = [1, 1]} : vector<16x96xf32> to vector<8x8xf32>
    %54 = vector.extract_strided_slice %30 {offsets = [8, 48], sizes = [8, 8], strides = [1, 1]} : vector<16x96xf32> to vector<8x8xf32>
    %55 = vector.extract_strided_slice %30 {offsets = [8, 56], sizes = [8, 8], strides = [1, 1]} : vector<16x96xf32> to vector<8x8xf32>
    %56 = vector.shape_cast %48 : vector<8x8xf32> to vector<1x8x8xf32>
    %57 = vector.shape_cast %49 : vector<8x8xf32> to vector<1x8x8xf32>
    %58 = vector.shape_cast %50 : vector<8x8xf32> to vector<1x8x8xf32>
    %59 = vector.shape_cast %51 : vector<8x8xf32> to vector<1x8x8xf32>
    %60 = vector.shape_cast %52 : vector<8x8xf32> to vector<1x8x8xf32>
    %61 = vector.shape_cast %53 : vector<8x8xf32> to vector<1x8x8xf32>
    %62 = vector.shape_cast %54 : vector<8x8xf32> to vector<1x8x8xf32>
    %63 = vector.shape_cast %55 : vector<8x8xf32> to vector<1x8x8xf32>
    %64 = tpu.concatenate %56, %57, %58, %59, %60, %61, %62, %63 in 0 : vector<1x8x8xf32>, vector<1x8x8xf32>, vector<1x8x8xf32>, vector<1x8x8xf32>, vector<1x8x8xf32>, vector<1x8x8xf32>, vector<1x8x8xf32>, vector<1x8x8xf32> -> vector<8x8x8xf32>
    %65 = vector.extract_strided_slice %30 {offsets = [0, 64], sizes = [8, 8], strides = [1, 1]} : vector<16x96xf32> to vector<8x8xf32>
    %66 = vector.extract_strided_slice %30 {offsets = [0, 72], sizes = [8, 8], strides = [1, 1]} : vector<16x96xf32> to vector<8x8xf32>
    %67 = vector.extract_strided_slice %30 {offsets = [0, 80], sizes = [8, 8], strides = [1, 1]} : vector<16x96xf32> to vector<8x8xf32>
    %68 = vector.extract_strided_slice %30 {offsets = [0, 88], sizes = [8, 8], strides = [1, 1]} : vector<16x96xf32> to vector<8x8xf32>
    %69 = vector.extract_strided_slice %30 {offsets = [8, 64], sizes = [8, 8], strides = [1, 1]} : vector<16x96xf32> to vector<8x8xf32>
    %70 = vector.extract_strided_slice %30 {offsets = [8, 72], sizes = [8, 8], strides = [1, 1]} : vector<16x96xf32> to vector<8x8xf32>
    %71 = vector.extract_strided_slice %30 {offsets = [8, 80], sizes = [8, 8], strides = [1, 1]} : vector<16x96xf32> to vector<8x8xf32>
    %72 = vector.extract_strided_slice %30 {offsets = [8, 88], sizes = [8, 8], strides = [1, 1]} : vector<16x96xf32> to vector<8x8xf32>
    %73 = vector.shape_cast %65 : vector<8x8xf32> to vector<1x8x8xf32>
    %74 = vector.shape_cast %66 : vector<8x8xf32> to vector<1x8x8xf32>
    %75 = vector.shape_cast %67 : vector<8x8xf32> to vector<1x8x8xf32>
    %76 = vector.shape_cast %68 : vector<8x8xf32> to vector<1x8x8xf32>
    %77 = vector.shape_cast %69 : vector<8x8xf32> to vector<1x8x8xf32>
    %78 = vector.shape_cast %70 : vector<8x8xf32> to vector<1x8x8xf32>
    %79 = vector.shape_cast %71 : vector<8x8xf32> to vector<1x8x8xf32>
    %80 = vector.shape_cast %72 : vector<8x8xf32> to vector<1x8x8xf32>
    %81 = tpu.concatenate %73, %74, %75, %76, %77, %78, %79, %80 in 0 : vector<1x8x8xf32>, vector<1x8x8xf32>, vector<1x8x8xf32>, vector<1x8x8xf32>, vector<1x8x8xf32>, vector<1x8x8xf32>, vector<1x8x8xf32>, vector<1x8x8xf32> -> vector<8x8x8xf32>
    "tpu.trace_start"() <{level = 10 : i32, message = "gqd,gkd->gqk"}> : () -> ()
    %cst_17 = arith.constant dense<0.000000e+00> : vector<8x8x8xf32>
    %82 = tpu.matmul %47, %64, %cst_17 {dimension_numbers = #tpu.dot_dimension_numbers<[2], [2], [1], [1], [0, 0, 0, 1, 1, 1], [0], [0]>} : vector<8x8x8xf32>, vector<8x8x8xf32>, vector<8x8x8xf32> -> vector<8x8x8xf32>
    "tpu.trace_stop"() : () -> ()
    %cst_18 = arith.constant 0.353553385 : f32
    %83 = vector.broadcast %cst_18 : f32 to vector<8x8x8xf32>
    %84 = arith.mulf %83, %82 : vector<8x8x8xf32>
    %85 = arith.addf %1, %84 : vector<8x8x8xf32>
    %cst_19 = arith.constant dense<0xFF800000> : vector<8x8xf32>
    %86 = vector.multi_reduction <maximumf>, %85, %cst_19 [2] : vector<8x8x8xf32> to vector<8x8xf32>
    %87 = vector.shape_cast %86 : vector<8x8xf32> to vector<8x8x1xf32>
    %88 = vector.broadcast %87 : vector<8x8x1xf32> to vector<8x8x8xf32>
    %89 = arith.subf %85, %88 : vector<8x8x8xf32>
    %90 = math.exp %89 : vector<8x8x8xf32>
    %cst_20 = arith.constant dense<0.000000e+00> : vector<8x8xf32>
    %91 = vector.multi_reduction <add>, %90, %cst_20 [2] : vector<8x8x8xf32> to vector<8x8xf32>
    %92 = vector.shape_cast %91 : vector<8x8xf32> to vector<8x8x1xf32>
    %93 = tpu.reciprocal %92 {approx = true} : vector<8x8x1xf32> -> vector<8x8x1xf32>
    %94 = vector.broadcast %93 : vector<8x8x1xf32> to vector<8x8x8xf32>
    %95 = arith.mulf %90, %94 : vector<8x8x8xf32>
    "tpu.trace_start"() <{level = 10 : i32, message = "gqk,gkd->gqd"}> : () -> ()
    %cst_21 = arith.constant dense<0.000000e+00> : vector<8x8x8xf32>
    %96 = tpu.matmul %95, %81, %cst_21 {dimension_numbers = #tpu.dot_dimension_numbers<[2], [1], [1], [2], [0, 0, 0, 1, 1, 2], [0], [0]>} : vector<8x8x8xf32>, vector<8x8x8xf32>, vector<8x8x8xf32> -> vector<8x8x8xf32>
    "tpu.trace_stop"() : () -> ()
    %97 = vector.extract_strided_slice %96 {offsets = [0, 0, 0], sizes = [1, 8, 8], strides = [1, 1, 1]} : vector<8x8x8xf32> to vector<1x8x8xf32>
    %98 = vector.shape_cast %97 : vector<1x8x8xf32> to vector<8x8xf32>
    %99 = vector.extract_strided_slice %96 {offsets = [1, 0, 0], sizes = [1, 8, 8], strides = [1, 1, 1]} : vector<8x8x8xf32> to vector<1x8x8xf32>
    %100 = vector.shape_cast %99 : vector<1x8x8xf32> to vector<8x8xf32>
    %101 = vector.extract_strided_slice %96 {offsets = [2, 0, 0], sizes = [1, 8, 8], strides = [1, 1, 1]} : vector<8x8x8xf32> to vector<1x8x8xf32>
    %102 = vector.shape_cast %101 : vector<1x8x8xf32> to vector<8x8xf32>
    %103 = vector.extract_strided_slice %96 {offsets = [3, 0, 0], sizes = [1, 8, 8], strides = [1, 1, 1]} : vector<8x8x8xf32> to vector<1x8x8xf32>
    %104 = vector.shape_cast %103 : vector<1x8x8xf32> to vector<8x8xf32>
    %105 = tpu.concatenate %98, %100, %102, %104 in 1 : vector<8x8xf32>, vector<8x8xf32>, vector<8x8xf32>, vector<8x8xf32> -> vector<8x32xf32>
    %106 = vector.extract_strided_slice %96 {offsets = [4, 0, 0], sizes = [1, 8, 8], strides = [1, 1, 1]} : vector<8x8x8xf32> to vector<1x8x8xf32>
    %107 = vector.shape_cast %106 : vector<1x8x8xf32> to vector<8x8xf32>
    %108 = vector.extract_strided_slice %96 {offsets = [5, 0, 0], sizes = [1, 8, 8], strides = [1, 1, 1]} : vector<8x8x8xf32> to vector<1x8x8xf32>
    %109 = vector.shape_cast %108 : vector<1x8x8xf32> to vector<8x8xf32>
    %110 = vector.extract_strided_slice %96 {offsets = [6, 0, 0], sizes = [1, 8, 8], strides = [1, 1, 1]} : vector<8x8x8xf32> to vector<1x8x8xf32>
    %111 = vector.shape_cast %110 : vector<1x8x8xf32> to vector<8x8xf32>
    %112 = vector.extract_strided_slice %96 {offsets = [7, 0, 0], sizes = [1, 8, 8], strides = [1, 1, 1]} : vector<8x8x8xf32> to vector<1x8x8xf32>
    %113 = vector.shape_cast %112 : vector<1x8x8xf32> to vector<8x8xf32>
    %114 = tpu.concatenate %107, %109, %111, %113 in 1 : vector<8x8xf32>, vector<8x8xf32>, vector<8x8xf32>, vector<8x8xf32> -> vector<8x32xf32>
    %115 = tpu.concatenate %105, %114 in 0 : vector<8x32xf32>, vector<8x32xf32> -> vector<16x32xf32>
    %c0_22 = arith.constant 0 : index
    %c0_23 = arith.constant 0 : index
    %116 = vector.load %arg8[%c0_22, %c0_23] : memref<32x32xf32, #tpu.memory_space<vmem>>, vector<32x32xf32>
    %cst_24 = arith.constant dense<0.000000e+00> : vector<16x32xf32>
    %117 = tpu.matmul %115, %116, %cst_24 {dimension_numbers = #tpu.dot_dimension_numbers<[1], [0], [0], [1], [0, 0, 1, 1], [], []>} : vector<16x32xf32>, vector<32x32xf32>, vector<16x32xf32> -> vector<16x32xf32>
    %c0_25 = arith.constant 0 : index
    %c0_26 = arith.constant 0 : index
    %118 = vector.load %arg9[%c0_25, %c0_26] : memref<1x32xf32, #tpu.memory_space<vmem>>, vector<1x32xf32>
    %119 = vector.broadcast %118 : vector<1x32xf32> to vector<16x32xf32>
    %120 = arith.addf %117, %119 : vector<16x32xf32>
    %121 = arith.addf %120, %0 : vector<16x32xf32>
    %c0_27 = arith.constant 0 : index
    %c0_28 = arith.constant 0 : index
    %122 = vector.load %arg4[%c0_27, %c0_28] : memref<1x32xf32, #tpu.memory_space<vmem>>, vector<1x32xf32>
    %c0_29 = arith.constant 0 : index
    %c0_30 = arith.constant 0 : index
    %123 = vector.load %arg5[%c0_29, %c0_30] : memref<1x32xf32, #tpu.memory_space<vmem>>, vector<1x32xf32>
    %cst_31 = arith.constant dense<0.000000e+00> : vector<16xf32>
    %124 = vector.multi_reduction <add>, %121, %cst_31 [1] : vector<16x32xf32> to vector<16xf32>
    %125 = vector.shape_cast %124 : vector<16xf32> to vector<16x1xf32>
    %cst_32 = arith.constant 3.200000e+01 : f32
    %126 = vector.broadcast %cst_32 : f32 to vector<16x1xf32>
    %127 = arith.divf %125, %126 : vector<16x1xf32>
    %128 = vector.broadcast %127 : vector<16x1xf32> to vector<16x32xf32>
    %129 = arith.subf %121, %128 : vector<16x32xf32>
    %130 = arith.mulf %129, %129 : vector<16x32xf32>
    %cst_33 = arith.constant dense<0.000000e+00> : vector<16xf32>
    %131 = vector.multi_reduction <add>, %130, %cst_33 [1] : vector<16x32xf32> to vector<16xf32>
    %132 = vector.shape_cast %131 : vector<16xf32> to vector<16x1xf32>
    %cst_34 = arith.constant 3.200000e+01 : f32
    %133 = vector.broadcast %cst_34 : f32 to vector<16x1xf32>
    %134 = arith.divf %132, %133 : vector<16x1xf32>
    %135 = vector.broadcast %127 : vector<16x1xf32> to vector<16x32xf32>
    %136 = arith.subf %121, %135 : vector<16x32xf32>
    %cst_35 = arith.constant 9.99999974E-6 : f32
    %137 = vector.broadcast %cst_35 : f32 to vector<16x1xf32>
    %138 = arith.addf %134, %137 : vector<16x1xf32>
    %139 = math.rsqrt %138 : vector<16x1xf32>
    %140 = vector.broadcast %139 : vector<16x1xf32> to vector<16x32xf32>
    %141 = arith.mulf %136, %140 : vector<16x32xf32>
    %142 = vector.broadcast %122 : vector<1x32xf32> to vector<16x32xf32>
    %143 = arith.mulf %141, %142 : vector<16x32xf32>
    %144 = vector.broadcast %123 : vector<1x32xf32> to vector<16x32xf32>
    %145 = arith.addf %143, %144 : vector<16x32xf32>
    %c0_36 = arith.constant 0 : index
    %c0_37 = arith.constant 0 : index
    %146 = vector.load %arg10[%c0_36, %c0_37] : memref<32x128xf32, #tpu.memory_space<vmem>>, vector<32x128xf32>
    %cst_38 = arith.constant dense<0.000000e+00> : vector<16x128xf32>
    %147 = tpu.matmul %145, %146, %cst_38 {dimension_numbers = #tpu.dot_dimension_numbers<[1], [0], [0], [1], [0, 0, 1, 1], [], []>} : vector<16x32xf32>, vector<32x128xf32>, vector<16x128xf32> -> vector<16x128xf32>
    %c0_39 = arith.constant 0 : index
    %c0_40 = arith.constant 0 : index
    %148 = vector.load %arg11[%c0_39, %c0_40] : memref<1x128xf32, #tpu.memory_space<vmem>>, vector<1x128xf32>
    %149 = vector.broadcast %148 : vector<1x128xf32> to vector<16x128xf32>
    %150 = arith.addf %147, %149 : vector<16x128xf32>
    %cst_41 = arith.constant 5.000000e-01 : f32
    %151 = vector.broadcast %cst_41 : f32 to vector<16x128xf32>
    %152 = arith.mulf %151, %150 : vector<16x128xf32>
    %cst_42 = arith.constant 0.797884583 : f32
    %153 = vector.broadcast %cst_42 : f32 to vector<16x128xf32>
    %154 = arith.mulf %153, %150 : vector<16x128xf32>
    %cst_43 = arith.constant 4.471500e-02 : f32
    %155 = vector.broadcast %cst_43 : f32 to vector<16x128xf32>
    %156 = arith.mulf %155, %150 : vector<16x128xf32>
    %157 = arith.mulf %156, %150 : vector<16x128xf32>
    %cst_44 = arith.constant 1.000000e+00 : f32
    %158 = vector.broadcast %cst_44 : f32 to vector<16x128xf32>
    %159 = arith.addf %158, %157 : vector<16x128xf32>
    %160 = arith.mulf %154, %159 : vector<16x128xf32>
    %161 = math.tanh %160 : vector<16x128xf32>
    %cst_45 = arith.constant 1.000000e+00 : f32
    %162 = vector.broadcast %cst_45 : f32 to vector<16x128xf32>
    %163 = arith.addf %162, %161 : vector<16x128xf32>
    %164 = arith.mulf %152, %163 : vector<16x128xf32>
    %c0_46 = arith.constant 0 : index
    %c0_47 = arith.constant 0 : index
    %165 = vector.load %arg12[%c0_46, %c0_47] : memref<128x32xf32, #tpu.memory_space<vmem>>, vector<128x32xf32>
    %cst_48 = arith.constant dense<0.000000e+00> : vector<16x32xf32>
    %166 = tpu.matmul %164, %165, %cst_48 {dimension_numbers = #tpu.dot_dimension_numbers<[1], [0], [0], [1], [0, 0, 1, 1], [], []>} : vector<16x128xf32>, vector<128x32xf32>, vector<16x32xf32> -> vector<16x32xf32>
    %c0_49 = arith.constant 0 : index
    %c0_50 = arith.constant 0 : index
    %167 = vector.load %arg13[%c0_49, %c0_50] : memref<1x32xf32, #tpu.memory_space<vmem>>, vector<1x32xf32>
    %168 = vector.broadcast %167 : vector<1x32xf32> to vector<16x32xf32>
    %169 = arith.addf %166, %168 : vector<16x32xf32>
    %170 = arith.addf %169, %121 : vector<16x32xf32>
    %c0_51 = arith.constant 0 : index
    %c0_52 = arith.constant 0 : index
    %171 = vector.load %arg14[%c0_51, %c0_52] : memref<16x32xf32, #tpu.memory_space<vmem>>, vector<16x32xf32>
    tpu.vector_store %arg14[%c0_51, %c0_52], %170 {strides = array<i32>} : memref<16x32xf32, #tpu.memory_space<vmem>>, vector<16x32xf32>,
    return
  }
}

</mosaic_0001>

<llo_original>
// kernel: tt_bloom_block.1
$region0: #{tt_bloom_block.1}
  #allocation0 [shape = 'u32[]', space=smem, size = 0x4, offset = 0x4, fixed_abs, tag = 'smem constant byte address 0x4 - core index']
  #allocation1 [shape = 'u32[144,128]{1,0:T(1,128)}', space=vmem, size = 0x12000, scoped, tag = 'internal scratch']
  %s0 = inlined_call_operand.vmem [shape: f32[16,32], index: 0, kind: input, shape index: {}]
  %s1 = inlined_call_operand.vmem [shape: f32[8,8,8], index: 1, kind: input, shape index: {}]
  %s2 = inlined_call_operand.vmem [shape: f32[1,32], index: 2, kind: input, shape index: {}]
  %s3 = inlined_call_operand.vmem [shape: f32[1,32], index: 3, kind: input, shape index: {}]
  %s4 = inlined_call_operand.vmem [shape: f32[1,32], index: 4, kind: input, shape index: {}]
  %s5 = inlined_call_operand.vmem [shape: f32[1,32], index: 5, kind: input, shape index: {}]
  %s6 = inlined_call_operand.vmem [shape: f32[32,96], index: 6, kind: input, shape index: {}]
  %s7 = inlined_call_operand.vmem [shape: f32[1,96], index: 7, kind: input, shape index: {}]
  %s8 = inlined_call_operand.vmem [shape: f32[32,32], index: 8, kind: input, shape index: {}]
  %s9 = inlined_call_operand.vmem [shape: f32[1,32], index: 9, kind: input, shape index: {}]
  %s10 = inlined_call_operand.vmem [shape: f32[32,128], index: 10, kind: input, shape index: {}]
  %s11 = inlined_call_operand.vmem [shape: f32[1,128], index: 11, kind: input, shape index: {}]
  %s12 = inlined_call_operand.vmem [shape: f32[128,32], index: 12, kind: input, shape index: {}]
  %s13 = inlined_call_operand.vmem [shape: f32[1,32], index: 13, kind: input, shape index: {}]
  %s14 = inlined_call_operand.hbm [shape: f32[16,32], index: 14, kind: output, shape index: {}]
  %s15 = sld [smem:[#allocation0]]
  $region66: #{tt_bloom_block.1} parent=0
    _
  %s17 = ssub.s32 1, %s15
  %s18 = scalar_select 0, %s17, %s15
  $region1: #{tt_bloom_block.1} parent=0
    #allocation2 [shape = 'u8[8192]{0}', space=vmem, size = 0x2000, scoped, tag = 'output window, operand 0, single buffered']
    #allocation3 [shape = 's32[1]{0}', space=sflag, size = 0x4, scoped, tag = 'scoped memory for tt_bloom_block.1']
    %19 = vsyncpa [#allocation3], 0
    // Predicated region
    $region2: #{tt_bloom_block.1} parent=1 // pred_check
      _
    $region3: #{tt_bloom_block.1} parent=1 // pred_check_branch
      %21 = sbr.rel (0) target = $region5
    $region4: #{tt_bloom_block.1} parent=1 // pred_region
      _
    $region5: #{tt_bloom_block.1} parent=1 // pred_fallthru
      _
    // Predicated region
    $region6: #{tt_bloom_block.1} parent=1 // pred_check
      _
    $region7: #{tt_bloom_block.1} parent=1 // pred_check_branch
      %23 = sbr.rel (0) target = $region9
    $region8: #{tt_bloom_block.1} parent=1 // pred_region
      _
    $region9: #{tt_bloom_block.1} parent=1 // pred_fallthru
      _
    // Predicated region
    $region10: #{tt_bloom_block.1} parent=1 // pred_check
      _
    $region11: #{tt_bloom_block.1} parent=1 // pred_check_branch
      %25 = sbr.rel (0) target = $region13
    $region12: #{tt_bloom_block.1} parent=1 // pred_region
      _
    $region13: #{tt_bloom_block.1} parent=1 // pred_fallthru
      _
    // Predicated region
    $region14: #{tt_bloom_block.1} parent=1 // pred_check
      _
    $region15: #{tt_bloom_block.1} parent=1 // pred_check_branch
      %27 = sbr.rel (0) target = $region17
    $region16: #{tt_bloom_block.1} parent=1 // pred_region
      _
    $region17: #{tt_bloom_block.1} parent=1 // pred_fallthru
      _
    // Predicated region
    $region18: #{tt_bloom_block.1} parent=1 // pred_check
      _
    $region19: #{tt_bloom_block.1} parent=1 // pred_check_branch
      %29 = sbr.rel (0) target = $region21
    $region20: #{tt_bloom_block.1} parent=1 // pred_region
      _
    $region21: #{tt_bloom_block.1} parent=1 // pred_fallthru
      _
    // Predicated region
    $region22: #{tt_bloom_block.1} parent=1 // pred_check
      _
    $region23: #{tt_bloom_block.1} parent=1 // pred_check_branch
      %31 = sbr.rel (0) target = $region25
    $region24: #{tt_bloom_block.1} parent=1 // pred_region
      _
    $region25: #{tt_bloom_block.1} parent=1 // pred_fallthru
      _
    // Predicated region
    $region26: #{tt_bloom_block.1} parent=1 // pred_check
      _
    $region27: #{tt_bloom_block.1} parent=1 // pred_check_branch
      %33 = sbr.rel (0) target = $region29
    $region28: #{tt_bloom_block.1} parent=1 // pred_region
      _
    $region29: #{tt_bloom_block.1} parent=1 // pred_fallthru
      _
    // Predicated region
    $region30: #{tt_bloom_block.1} parent=1 // pred_check
      _
    $region31: #{tt_bloom_block.1} parent=1 // pred_check_branch
      %35 = sbr.rel (0) target = $region33
    $region32: #{tt_bloom_block.1} parent=1 // pred_region
      _
    $region33: #{tt_bloom_block.1} parent=1 // pred_fallthru
      _
    // Predicated region
    $region34: #{tt_bloom_block.1} parent=1 // pred_check
      _
    $region35: #{tt_bloom_block.1} parent=1 // pred_check_branch
      %37 = sbr.rel (0) target = $region37
    $region36: #{tt_bloom_block.1} parent=1 // pred_region
      _
    $region37: #{tt_bloom_block.1} parent=1 // pred_fallthru
      _
    // Predicated region
    $region38: #{tt_bloom_block.1} parent=1 // pred_check
      _
    $region39: #{tt_bloom_block.1} parent=1 // pred_check_branch
      %39 = sbr.rel (0) target = $region41
    $region40: #{tt_bloom_block.1} parent=1 // pred_region
      _
    $region41: #{tt_bloom_block.1} parent=1 // pred_fallthru
      _
    // Predicated region
    $region42: #{tt_bloom_block.1} parent=1 // pred_check
      _
    $region43: #{tt_bloom_block.1} parent=1 // pred_check_branch
      %41 = sbr.rel (0) target = $region45
    $region44: #{tt_bloom_block.1} parent=1 // pred_region
      _
    $region45: #{tt_bloom_block.1} parent=1 // pred_fallthru
      _
    // Predicated region
    $region46: #{tt_bloom_block.1} parent=1 // pred_check
      _
    $region47: #{tt_bloom_block.1} parent=1 // pred_check_branch
      %43 = sbr.rel (0) target = $region49
    $region48: #{tt_bloom_block.1} parent=1 // pred_region
      _
    $region49: #{tt_bloom_block.1} parent=1 // pred_fallthru
      _
    // Predicated region
    $region50: #{tt_bloom_block.1} parent=1 // pred_check
      _
    $region51: #{tt_bloom_block.1} parent=1 // pred_check_branch
      %45 = sbr.rel (0) target = $region53
    $region52: #{tt_bloom_block.1} parent=1 // pred_region
      _
    $region53: #{tt_bloom_block.1} parent=1 // pred_fallthru
      _
    // Predicated region
    $region54: #{tt_bloom_block.1} parent=1 // pred_check
      _
    $region55: #{tt_bloom_block.1} parent=1 // pred_check_branch
      %47 = sbr.rel (0) target = $region57
    $region56: #{tt_bloom_block.1} parent=1 // pred_region
      _
    $region57: #{tt_bloom_block.1} parent=1 // pred_fallthru
      _
    %v48 = vld [vmem:[%s0] sm:$0xff]
    %v49 = vld [vmem:[%s0 + $0x8] sm:$0xff]
    %v50 = vld [vmem:[%s1] sm:$0xff]
    %v51 = vld [vmem:[%s1 + $0x8] sm:$0xff]
    %v52 = vld [vmem:[%s1 + $0x10] sm:$0xff]
    %v53 = vld [vmem:[%s1 + $0x18] sm:$0xff]
    %v54 = vld [vmem:[%s1 + $0x20] sm:$0xff]
    %v55 = vld [vmem:[%s1 + $0x28] sm:$0xff]
    %v56 = vld [vmem:[%s1 + $0x30] sm:$0xff]
    %v57 = vld [vmem:[%s1 + $0x38] sm:$0xff]
    %v58 = vld [vmem:[%s2] sm:$0x1]
    %v59 = vld [vmem:[%s3] sm:$0x1]
    %vm60 = vcmask 261120
    %v61 = vsel %vm60, %v48, 0.0
    %62 = vadd.xlane.f32.xlu0 %v61
    %v63 = vpop.xlane.xlu0 %62
    %v64 = vsel %vm60, %v49, 0.0
    %65 = vadd.xlane.f32.xlu0 %v64
    %v66 = vpop.xlane.xlu0 %65
    %v67 = vrcp.pop 32.0
    %v68 = vmul.f32 %v63, %v67
    %v69 = vmul.f32 %v66, %v67
    %v70 = vsub.f32 %v48, %v68
    %v71 = vsub.f32 %v49, %v69
    %v72 = vmul.f32 %v70, %v70
    %v73 = vmul.f32 %v71, %v71
    %v74 = vsel %vm60, %v72, 0.0
    %75 = vadd.xlane.f32.xlu0 %v74
    %v76 = vpop.xlane.xlu0 %75
    %v77 = vsel %vm60, %v73, 0.0
    %78 = vadd.xlane.f32.xlu0 %v77
    %v79 = vpop.xlane.xlu0 %78
    %v80 = vmul.f32 %v76, %v67
    %v81 = vmul.f32 %v79, %v67
    %v82 = vadd.f32 %v80, 1e-05
    %v83 = vadd.f32 %v81, 1e-05
    %v84 = vrsqrt.pop %v82
    %v85 = vrsqrt.pop %v83
    %v86 = vmul.f32 %v70, %v84
    %v87 = vmul.f32 %v71, %v85
    %v89 = vlaneseq
    %v90 = vshrl.u32 %v89, 7
    %v91 = vsub.s32 0, %v90
    %v92 = vrot.slane %v58, %v91
    %v94 = vmul.f32 %v86, %v92
    %v95 = vmul.f32 %v87, %v92
    %v97 = vlaneseq
    %v98 = vshrl.u32 %v97, 7
    %v99 = vsub.s32 0, %v98
    %v100 = vrot.slane %v59, %v99
    %v102 = vadd.f32 %v94, %v100
    %v103 = vadd.f32 %v95, %v100
    %v104 = vld [vmem:[%s6] sm:$0xff]
    %v105 = vld [vmem:[%s6 + $0x8] sm:$0xff]
    %v106 = vld [vmem:[%s6 + $0x10] sm:$0xff]
    %v107 = vld [vmem:[%s6 + $0x18] sm:$0xff]
    %v108 = vld [vmem:[%s7] sm:$0x1]
    %v110 = vlaneseq
    %v111 = vshrl.u32 %v110, 7
    %v112 = vsub.s32 0, %v111
    %v113 = vrot.slane %v108, %v112
    %v116 = vsel %vm60, %v102, 0
    %v119 = vsel %vm60, %v103, 0
    %121 = vmatprep.subr.mxu0 0.0
    %122 = vmatpush1.msra.mxu0 %v104
    %123 = vmatprep.subr.mxu0 0.0
    %124 = vmatpush1.msra.mxu0 %v105
    %125 = vmatprep.subr.mxu0 0.0
    %126 = vmatpush1.msra.mxu0 %v106
    %127 = vmatprep.subr.mxu0 0.0
    %128 = vmatpush1.msra.mxu0 %v107
    %129 = vmatprep.subr.mxu0 0.0
    %130 = vmatpush1.msra.mxu0 0.0
    %131 = vmatprep.subr.mxu0 0.0
    %132 = vmatpush1.msra.mxu0 0.0
    %133 = vmatprep.subr.mxu0 0.0
    %134 = vmatpush1.msra.mxu0 0.0
    %135 = vmatprep.subr.mxu0 0.0
    %136 = vmatpush1.msra.mxu0 0.0
    %137 = vmatprep.subr.mxu0 0.0
    %138 = vmatpush1.msra.mxu0 0.0
    %139 = vmatprep.subr.mxu0 0.0
    %140 = vmatpush1.msra.mxu0 0.0
    %141 = vmatprep.subr.mxu0 0.0
    %142 = vmatpush1.msra.mxu0 0.0
    %143 = vmatprep.subr.mxu0 0.0
    %144 = vmatpush1.msra.mxu0 0.0
    %145 = vmatprep.subr.mxu0 0.0
    %146 = vmatpush1.msra.mxu0 0.0
    %147 = vmatprep.subr.mxu0 0.0
    %148 = vmatpush1.msra.mxu0 0.0
    %149 = vmatprep.subr.mxu0 0.0
    %150 = vmatpush1.msra.mxu0 0.0
    %151 = vmatprep.subr.mxu0 0.0
    %152 = vmatpush1.msra.mxu0 0.0
    %153 = vmatprep.subr.mxu0 0.0
    %154 = vmatpush1.msra.mxu0 0.0
    %155 = vmatprep.subr.mxu0 0.0
    %156 = vmatpush1.msra.mxu0 0.0
    %157 = vmatprep.subr.mxu0 0.0
    %158 = vmatpush1.msra.mxu0 0.0
    %159 = vmatprep.subr.mxu0 0.0
    %160 = vmatpush1.msra.mxu0 0.0
    %161 = vmatprep.subr.mxu0 0.0
    %162 = vmatpush1.msra.mxu0 0.0
    %163 = vmatprep.subr.mxu0 0.0
    %164 = vmatpush1.msra.mxu0 0.0
    %165 = vmatprep.subr.mxu0 0.0
    %166 = vmatpush1.msra.mxu0 0.0
    %167 = vmatprep.subr.mxu0 0.0
    %168 = vmatpush1.msra.mxu0 0.0
    %169 = vmatprep.subr.mxu0 0.0
    %170 = vmatpush1.msra.mxu0 0.0
    %171 = vmatprep.subr.mxu0 0.0
    %172 = vmatpush1.msra.mxu0 0.0
    %173 = vmatprep.subr.mxu0 0.0
    %174 = vmatpush1.msra.mxu0 0.0
    %175 = vmatprep.subr.mxu0 0.0
    %176 = vmatpush1.msra.mxu0 0.0
    %177 = vmatprep.subr.mxu0 0.0
    %178 = vmatpush1.msra.mxu0 0.0
    %179 = vmatprep.subr.mxu0 0.0
    %180 = vmatpush1.msra.mxu0 0.0
    %181 = vmatprep.subr.mxu0 0.0
    %182 = vmatpush1.msra.mxu0 0.0
    %183 = vmatprep.subr.mxu0 0.0
    %184 = vmatpush1.msra.mxu0 0.0
    %185 = vmatprep.mubr.f32.mxu0 0.0
    %186 = vmatmul.mubr.f32.gmra.mrb[0].mxu0 %v116
    %v187 = vpop.f32.mrb[0].mxu0
    %v188 = vadd.f32 %v113, %v187
    %v189 = vpop.f32.mrb[0].mxu0
    %190 = vmatprep.mubr.f32.mxu0 0.0
    %191 = vmatmul.mubr.f32.gmra.mrb[0].mxu0 %v119
    %v192 = vpop.f32.mrb[0].mxu0
    %v193 = vadd.f32 %v113, %v192
    %v194 = vpop.f32.mrb[0].mxu0
    %195 = vdwg.mxu0
    %197 = vrot.lane.b32.xlu0 %v188, 120
    %v198 = vpop.permute.xlu0 %197
    %199 = vrot.lane.b32.xlu0 %v188, 112
    %v200 = vpop.permute.xlu0 %199
    %201 = vrot.lane.b32.xlu0 %v188, 104
    %v202 = vpop.permute.xlu0 %201
    %204 = vrot.lane.b32.xlu0 %v193, 120
    %v205 = vpop.permute.xlu0 %204
    %206 = vrot.lane.b32.xlu0 %v193, 112
    %v207 = vpop.permute.xlu0 %206
    %208 = vrot.lane.b32.xlu0 %v193, 104
    %v209 = vpop.permute.xlu0 %208
    %210 = vrot.lane.b32.xlu0 %v188, 96
    %v211 = vpop.permute.xlu0 %210
    %vm212 = vcmask 64512
    %v213 = vsel %vm212, %v188, 0
    %v215 = vsel %vm212, %v211, 0
    %217 = vmatprep.subr.mxu0 0.0
    %218 = vmatpush1.xpose.msra.mxu0 %v215
    %219 = vmatprep.subr.mxu0 0.0
    %220 = vmatpush1.xpose.msra.mxu0 0.0
    %221 = vmatprep.subr.mxu0 0.0
    %222 = vmatpush1.xpose.msra.mxu0 0.0
    %223 = vmatprep.subr.mxu0 0.0
    %224 = vmatpush1.xpose.msra.mxu0 0.0
    %225 = vmatprep.subr.mxu0 0.0
    %226 = vmatpush1.xpose.msra.mxu0 0.0
    %227 = vmatprep.subr.mxu0 0.0
    %228 = vmatpush1.xpose.msra.mxu0 0.0
    %229 = vmatprep.subr.mxu0 0.0
    %230 = vmatpush1.xpose.msra.mxu0 0.0
    %231 = vmatprep.subr.mxu0 0.0
    %232 = vmatpush1.xpose.msra.mxu0 0.0
    %233 = vmatprep.subr.mxu0 0.0
    %234 = vmatpush1.xpose.msra.mxu0 0.0
    %235 = vmatprep.subr.mxu0 0.0
    %236 = vmatpush1.xpose.msra.mxu0 0.0
    %237 = vmatprep.subr.mxu0 0.0
    %238 = vmatpush1.xpose.msra.mxu0 0.0
    %239 = vmatprep.subr.mxu0 0.0
    %240 = vmatpush1.xpose.msra.mxu0 0.0
    %241 = vmatprep.subr.mxu0 0.0
    %242 = vmatpush1.xpose.msra.mxu0 0.0
    %243 = vmatprep.subr.mxu0 0.0
    %244 = vmatpush1.xpose.msra.mxu0 0.0
    %245 = vmatprep.subr.mxu0 0.0
    %246 = vmatpush1.xpose.msra.mxu0 0.0
    %247 = vmatprep.subr.mxu0 0.0
    %248 = vmatpush1.xpose.msra.mxu0 0.0
    %249 = vmatprep.subr.mxu0 0.0
    %250 = vmatpush1.xpose.msra.mxu0 0.0
    %251 = vmatprep.subr.mxu0 0.0
    %252 = vmatpush1.xpose.msra.mxu0 0.0
    %253 = vmatprep.subr.mxu0 0.0
    %254 = vmatpush1.xpose.msra.mxu0 0.0
    %255 = vmatprep.subr.mxu0 0.0
    %256 = vmatpush1.xpose.msra.mxu0 0.0
    %257 = vmatprep.subr.mxu0 0.0
    %258 = vmatpush1.xpose.msra.mxu0 0.0
    %259 = vmatprep.subr.mxu0 0.0
    %260 = vmatpush1.xpose.msra.mxu0 0.0
    %261 = vmatprep.subr.mxu0 0.0
    %262 = vmatpush1.xpose.msra.mxu0 0.0
    %263 = vmatprep.subr.mxu0 0.0
    %264 = vmatpush1.xpose.msra.mxu0 0.0
    %265 = vmatprep.subr.mxu0 0.0
    %266 = vmatpush1.xpose.msra.mxu0 0.0
    %267 = vmatprep.subr.mxu0 0.0
    %268 = vmatpush1.xpose.msra.mxu0 0.0
    %269 = vmatprep.subr.mxu0 0.0
    %270 = vmatpush1.xpose.msra.mxu0 0.0
    %271 = vmatprep.subr.mxu0 0.0
    %272 = vmatpush1.xpose.msra.mxu0 0.0
    %273 = vmatprep.subr.mxu0 0.0
    %274 = vmatpush1.xpose.msra.mxu0 0.0
    %275 = vmatprep.subr.mxu0 0.0
    %276 = vmatpush1.xpose.msra.mxu0 0.0
    %277 = vmatprep.subr.mxu0 0.0
    %278 = vmatpush1.xpose.msra.mxu0 0.0
    %279 = vmatprep.subr.mxu0 0.0
    %280 = vmatpush1.xpose.msra.mxu0 0.0
    %281 = vmatprep.mubr.f32.mxu0 0.0
    %282 = vmatmul.mubr.f32.gmra.mrb[0].mxu0 %v213
    %v283 = vpop.f32.mrb[0].mxu0
    %v284 = vadd.f32 0.0, %v283
    %v285 = vpop.f32.mrb[0].mxu0
    %286 = vdwg.mxu0
    %287 = vrot.lane.b32.xlu0 %v198, 96
    %v288 = vpop.permute.xlu0 %287
    %v289 = vsel %vm212, %v198, 0
    %v291 = vsel %vm212, %v288, 0
    %293 = vmatprep.subr.mxu0 0.0
    %294 = vmatpush1.xpose.msra.mxu0 %v291
    %295 = vmatprep.subr.mxu0 0.0
    %296 = vmatpush1.xpose.msra.mxu0 0.0
    %297 = vmatprep.subr.mxu0 0.0
    %298 = vmatpush1.xpose.msra.mxu0 0.0
    %299 = vmatprep.subr.mxu0 0.0
    %300 = vmatpush1.xpose.msra.mxu0 0.0
    %301 = vmatprep.subr.mxu0 0.0
    %302 = vmatpush1.xpose.msra.mxu0 0.0
    %303 = vmatprep.subr.mxu0 0.0
    %304 = vmatpush1.xpose.msra.mxu0 0.0
    %305 = vmatprep.subr.mxu0 0.0
    %306 = vmatpush1.xpose.msra.mxu0 0.0
    %307 = vmatprep.subr.mxu0 0.0
    %308 = vmatpush1.xpose.msra.mxu0 0.0
    %309 = vmatprep.subr.mxu0 0.0
    %310 = vmatpush1.xpose.msra.mxu0 0.0
    %311 = vmatprep.subr.mxu0 0.0
    %312 = vmatpush1.xpose.msra.mxu0 0.0
    %313 = vmatprep.subr.mxu0 0.0
    %314 = vmatpush1.xpose.msra.mxu0 0.0
    %315 = vmatprep.subr.mxu0 0.0
    %316 = vmatpush1.xpose.msra.mxu0 0.0
    %317 = vmatprep.subr.mxu0 0.0
    %318 = vmatpush1.xpose.msra.mxu0 0.0
    %319 = vmatprep.subr.mxu0 0.0
    %320 = vmatpush1.xpose.msra.mxu0 0.0
    %321 = vmatprep.subr.mxu0 0.0
    %322 = vmatpush1.xpose.msra.mxu0 0.0
    %323 = vmatprep.subr.mxu0 0.0
    %324 = vmatpush1.xpose.msra.mxu0 0.0
    %325 = vmatprep.subr.mxu0 0.0
    %326 = vmatpush1.xpose.msra.mxu0 0.0
    %327 = vmatprep.subr.mxu0 0.0
    %328 = vmatpush1.xpose.msra.mxu0 0.0
    %329 = vmatprep.subr.mxu0 0.0
    %330 = vmatpush1.xpose.msra.mxu0 0.0
    %331 = vmatprep.subr.mxu0 0.0
    %332 = vmatpush1.xpose.msra.mxu0 0.0
    %333 = vmatprep.subr.mxu0 0.0
    %334 = vmatpush1.xpose.msra.mxu0 0.0
    %335 = vmatprep.subr.mxu0 0.0
    %336 = vmatpush1.xpose.msra.mxu0 0.0
    %337 = vmatprep.subr.mxu0 0.0
    %338 = vmatpush1.xpose.msra.mxu0 0.0
    %339 = vmatprep.subr.mxu0 0.0
    %340 = vmatpush1.xpose.msra.mxu0 0.0
    %341 = vmatprep.subr.mxu0 0.0
    %342 = vmatpush1.xpose.msra.mxu0 0.0
    %343 = vmatprep.subr.mxu0 0.0
    %344 = vmatpush1.xpose.msra.mxu0 0.0
    %345 = vmatprep.subr.mxu0 0.0
    %346 = vmatpush1.xpose.msra.mxu0 0.0
    %347 = vmatprep.subr.mxu0 0.0
    %348 = vmatpush1.xpose.msra.mxu0 0.0
    %349 = vmatprep.subr.mxu0 0.0
    %350 = vmatpush1.xpose.msra.mxu0 0.0
    %351 = vmatprep.subr.mxu0 0.0
    %352 = vmatpush1.xpose.msra.mxu0 0.0
    %353 = vmatprep.subr.mxu0 0.0
    %354 = vmatpush1.xpose.msra.mxu0 0.0
    %355 = vmatprep.subr.mxu0 0.0
    %356 = vmatpush1.xpose.msra.mxu0 0.0
    %357 = vmatprep.mubr.f32.mxu0 0.0
    %358 = vmatmul.mubr.f32.gmra.mrb[0].mxu0 %v289
    %v359 = vpop.f32.mrb[0].mxu0
    %v360 = vadd.f32 0.0, %v359
    %v361 = vpop.f32.mrb[0].mxu0
    %362 = vdwg.mxu0
    %363 = vrot.lane.b32.xlu0 %v200, 96
    %v364 = vpop.permute.xlu0 %363
    %v365 = vsel %vm212, %v200, 0
    %v367 = vsel %vm212, %v364, 0
    %369 = vmatprep.subr.mxu0 0.0
    %370 = vmatpush1.xpose.msra.mxu0 %v367
    %371 = vmatprep.subr.mxu0 0.0
    %372 = vmatpush1.xpose.msra.mxu0 0.0
    %373 = vmatprep.subr.mxu0 0.0
    %374 = vmatpush1.xpose.msra.mxu0 0.0
    %375 = vmatprep.subr.mxu0 0.0
    %376 = vmatpush1.xpose.msra.mxu0 0.0
    %377 = vmatprep.subr.mxu0 0.0
    %378 = vmatpush1.xpose.msra.mxu0 0.0
    %379 = vmatprep.subr.mxu0 0.0
    %380 = vmatpush1.xpose.msra.mxu0 0.0
    %381 = vmatprep.subr.mxu0 0.0
    %382 = vmatpush1.xpose.msra.mxu0 0.0
    %383 = vmatprep.subr.mxu0 0.0
    %384 = vmatpush1.xpose.msra.mxu0 0.0
    %385 = vmatprep.subr.mxu0 0.0
    %386 = vmatpush1.xpose.msra.mxu0 0.0
    %387 = vmatprep.subr.mxu0 0.0
    %388 = vmatpush1.xpose.msra.mxu0 0.0
    %389 = vmatprep.subr.mxu0 0.0
    %390 = vmatpush1.xpose.msra.mxu0 0.0
    %391 = vmatprep.subr.mxu0 0.0
    %392 = vmatpush1.xpose.msra.mxu0 0.0
    %393 = vmatprep.subr.mxu0 0.0
    %394 = vmatpush1.xpose.msra.mxu0 0.0
    %395 = vmatprep.subr.mxu0 0.0
    %396 = vmatpush1.xpose.msra.mxu0 0.0
    %397 = vmatprep.subr.mxu0 0.0
    %398 = vmatpush1.xpose.msra.mxu0 0.0
    %399 = vmatprep.subr.mxu0 0.0
    %400 = vmatpush1.xpose.msra.mxu0 0.0
    %401 = vmatprep.subr.mxu0 0.0
    %402 = vmatpush1.xpose.msra.mxu0 0.0
    %403 = vmatprep.subr.mxu0 0.0
    %404 = vmatpush1.xpose.msra.mxu0 0.0
    %405 = vmatprep.subr.mxu0 0.0
    %406 = vmatpush1.xpose.msra.mxu0 0.0
    %407 = vmatprep.subr.mxu0 0.0
    %408 = vmatpush1.xpose.msra.mxu0 0.0
    %409 = vmatprep.subr.mxu0 0.0
    %410 = vmatpush1.xpose.msra.mxu0 0.0
    %411 = vmatprep.subr.mxu0 0.0
    %412 = vmatpush1.xpose.msra.mxu0 0.0
    %413 = vmatprep.subr.mxu0 0.0
    %414 = vmatpush1.xpose.msra.mxu0 0.0
    %415 = vmatprep.subr.mxu0 0.0
    %416 = vmatpush1.xpose.msra.mxu0 0.0
    %417 = vmatprep.subr.mxu0 0.0
    %418 = vmatpush1.xpose.msra.mxu0 0.0
    %419 = vmatprep.subr.mxu0 0.0
    %420 = vmatpush1.xpose.msra.mxu0 0.0
    %421 = vmatprep.subr.mxu0 0.0
    %422 = vmatpush1.xpose.msra.mxu0 0.0
    %423 = vmatprep.subr.mxu0 0.0
    %424 = vmatpush1.xpose.msra.mxu0 0.0
    %425 = vmatprep.subr.mxu0 0.0
    %426 = vmatpush1.xpose.msra.mxu0 0.0
    %427 = vmatprep.subr.mxu0 0.0
    %428 = vmatpush1.xpose.msra.mxu0 0.0
    %429 = vmatprep.subr.mxu0 0.0
    %430 = vmatpush1.xpose.msra.mxu0 0.0
    %431 = vmatprep.subr.mxu0 0.0
    %432 = vmatpush1.xpose.msra.mxu0 0.0
    %433 = vmatprep.mubr.f32.mxu0 0.0
    %434 = vmatmul.mubr.f32.gmra.mrb[0].mxu0 %v365
    %v435 = vpop.f32.mrb[0].mxu0
    %v436 = vadd.f32 0.0, %v435
    %v437 = vpop.f32.mrb[0].mxu0
    %438 = vdwg.mxu0
    %439 = vrot.lane.b32.xlu0 %v202, 96
    %v440 = vpop.permute.xlu0 %439
    %v441 = vsel %vm212, %v202, 0
    %v443 = vsel %vm212, %v440, 0
    %445 = vmatprep.subr.mxu0 0.0
    %446 = vmatpush1.xpose.msra.mxu0 %v443
    %447 = vmatprep.subr.mxu0 0.0
    %448 = vmatpush1.xpose.msra.mxu0 0.0
    %449 = vmatprep.subr.mxu0 0.0
    %450 = vmatpush1.xpose.msra.mxu0 0.0
    %451 = vmatprep.subr.mxu0 0.0
    %452 = vmatpush1.xpose.msra.mxu0 0.0
    %453 = vmatprep.subr.mxu0 0.0
    %454 = vmatpush1.xpose.msra.mxu0 0.0
    %455 = vmatprep.subr.mxu0 0.0
    %456 = vmatpush1.xpose.msra.mxu0 0.0
    %457 = vmatprep.subr.mxu0 0.0
    %458 = vmatpush1.xpose.msra.mxu0 0.0
    %459 = vmatprep.subr.mxu0 0.0
    %460 = vmatpush1.xpose.msra.mxu0 0.0
    %461 = vmatprep.subr.mxu0 0.0
    %462 = vmatpush1.xpose.msra.mxu0 0.0
    %463 = vmatprep.subr.mxu0 0.0
    %464 = vmatpush1.xpose.msra.mxu0 0.0
    %465 = vmatprep.subr.mxu0 0.0
    %466 = vmatpush1.xpose.msra.mxu0 0.0
    %467 = vmatprep.subr.mxu0 0.0
    %468 = vmatpush1.xpose.msra.mxu0 0.0
    %469 = vmatprep.subr.mxu0 0.0
    %470 = vmatpush1.xpose.msra.mxu0 0.0
    %471 = vmatprep.subr.mxu0 0.0
    %472 = vmatpush1.xpose.msra.mxu0 0.0
    %473 = vmatprep.subr.mxu0 0.0
    %474 = vmatpush1.xpose.msra.mxu0 0.0
    %475 = vmatprep.subr.mxu0 0.0
    %476 = vmatpush1.xpose.msra.mxu0 0.0
    %477 = vmatprep.subr.mxu0 0.0
    %478 = vmatpush1.xpose.msra.mxu0 0.0
    %479 = vmatprep.subr.mxu0 0.0
    %480 = vmatpush1.xpose.msra.mxu0 0.0
    %481 = vmatprep.subr.mxu0 0.0
    %482 = vmatpush1.xpose.msra.mxu0 0.0
    %483 = vmatprep.subr.mxu0 0.0
    %484 = vmatpush1.xpose.msra.mxu0 0.0
    %485 = vmatprep.subr.mxu0 0.0
    %486 = vmatpush1.xpose.msra.mxu0 0.0
    %487 = vmatprep.subr.mxu0 0.0
    %488 = vmatpush1.xpose.msra.mxu0 0.0
    %489 = vmatprep.subr.mxu0 0.0
    %490 = vmatpush1.xpose.msra.mxu0 0.0
    %491 = vmatprep.subr.mxu0 0.0
    %492 = vmatpush1.xpose.msra.mxu0 0.0
    %493 = vmatprep.subr.mxu0 0.0
    %494 = vmatpush1.xpose.msra.mxu0 0.0
    %495 = vmatprep.subr.mxu0 0.0
    %496 = vmatpush1.xpose.msra.mxu0 0.0
    %497 = vmatprep.subr.mxu0 0.0
    %498 = vmatpush1.xpose.msra.mxu0 0.0
    %499 = vmatprep.subr.mxu0 0.0
    %500 = vmatpush1.xpose.msra.mxu0 0.0
    %501 = vmatprep.subr.mxu0 0.0
    %502 = vmatpush1.xpose.msra.mxu0 0.0
    %503 = vmatprep.subr.mxu0 0.0
    %504 = vmatpush1.xpose.msra.mxu0 0.0
    %505 = vmatprep.subr.mxu0 0.0
    %506 = vmatpush1.xpose.msra.mxu0 0.0
    %507 = vmatprep.subr.mxu0 0.0
    %508 = vmatpush1.xpose.msra.mxu0 0.0
    %509 = vmatprep.mubr.f32.mxu0 0.0
    %510 = vmatmul.mubr.f32.gmra.mrb[0].mxu0 %v441
    %v511 = vpop.f32.mrb[0].mxu0
    %v512 = vadd.f32 0.0, %v511
    %v513 = vpop.f32.mrb[0].mxu0
    %514 = vdwg.mxu0
    %515 = vrot.lane.b32.xlu0 %v193, 96
    %v516 = vpop.permute.xlu0 %515
    %v517 = vsel %vm212, %v193, 0
    %v519 = vsel %vm212, %v516, 0
    %521 = vmatprep.subr.mxu0 0.0
    %522 = vmatpush1.xpose.msra.mxu0 %v519
    %523 = vmatprep.subr.mxu0 0.0
    %524 = vmatpush1.xpose.msra.mxu0 0.0
    %525 = vmatprep.subr.mxu0 0.0
    %526 = vmatpush1.xpose.msra.mxu0 0.0
    %527 = vmatprep.subr.mxu0 0.0
    %528 = vmatpush1.xpose.msra.mxu0 0.0
    %529 = vmatprep.subr.mxu0 0.0
    %530 = vmatpush1.xpose.msra.mxu0 0.0
    %531 = vmatprep.subr.mxu0 0.0
    %532 = vmatpush1.xpose.msra.mxu0 0.0
    %533 = vmatprep.subr.mxu0 0.0
    %534 = vmatpush1.xpose.msra.mxu0 0.0
    %535 = vmatprep.subr.mxu0 0.0
    %536 = vmatpush1.xpose.msra.mxu0 0.0
    %537 = vmatprep.subr.mxu0 0.0
    %538 = vmatpush1.xpose.msra.mxu0 0.0
    %539 = vmatprep.subr.mxu0 0.0
    %540 = vmatpush1.xpose.msra.mxu0 0.0
    %541 = vmatprep.subr.mxu0 0.0
    %542 = vmatpush1.xpose.msra.mxu0 0.0
    %543 = vmatprep.subr.mxu0 0.0
    %544 = vmatpush1.xpose.msra.mxu0 0.0
    %545 = vmatprep.subr.mxu0 0.0
    %546 = vmatpush1.xpose.msra.mxu0 0.0
    %547 = vmatprep.subr.mxu0 0.0
    %548 = vmatpush1.xpose.msra.mxu0 0.0
    %549 = vmatprep.subr.mxu0 0.0
    %550 = vmatpush1.xpose.msra.mxu0 0.0
    %551 = vmatprep.subr.mxu0 0.0
    %552 = vmatpush1.xpose.msra.mxu0 0.0
    %553 = vmatprep.subr.mxu0 0.0
    %554 = vmatpush1.xpose.msra.mxu0 0.0
    %555 = vmatprep.subr.mxu0 0.0
    %556 = vmatpush1.xpose.msra.mxu0 0.0
    %557 = vmatprep.subr.mxu0 0.0
    %558 = vmatpush1.xpose.msra.mxu0 0.0
    %559 = vmatprep.subr.mxu0 0.0
    %560 = vmatpush1.xpose.msra.mxu0 0.0
    %561 = vmatprep.subr.mxu0 0.0
    %562 = vmatpush1.xpose.msra.mxu0 0.0
    %563 = vmatprep.subr.mxu0 0.0
    %564 = vmatpush1.xpose.msra.mxu0 0.0
    %565 = vmatprep.subr.mxu0 0.0
    %566 = vmatpush1.xpose.msra.mxu0 0.0
    %567 = vmatprep.subr.mxu0 0.0
    %568 = vmatpush1.xpose.msra.mxu0 0.0
    %569 = vmatprep.subr.mxu0 0.0
    %570 = vmatpush1.xpose.msra.mxu0 0.0
    %571 = vmatprep.subr.mxu0 0.0
    %572 = vmatpush1.xpose.msra.mxu0 0.0
    %573 = vmatprep.subr.mxu0 0.0
    %574 = vmatpush1.xpose.msra.mxu0 0.0
    %575 = vmatprep.subr.mxu0 0.0
    %576 = vmatpush1.xpose.msra.mxu0 0.0
    %577 = vmatprep.subr.mxu0 0.0
    %578 = vmatpush1.xpose.msra.mxu0 0.0
    %579 = vmatprep.subr.mxu0 0.0
    %580 = vmatpush1.xpose.msra.mxu0 0.0
    %581 = vmatprep.subr.mxu0 0.0
    %582 = vmatpush1.xpose.msra.mxu0 0.0
    %583 = vmatprep.subr.mxu0 0.0
    %584 = vmatpush1.xpose.msra.mxu0 0.0
    %585 = vmatprep.mubr.f32.mxu0 0.0
    %586 = vmatmul.mubr.f32.gmra.mrb[0].mxu0 %v517
    %v587 = vpop.f32.mrb[0].mxu0
    %v588 = vadd.f32 0.0, %v587
    %v589 = vpop.f32.mrb[0].mxu0
    %590 = vdwg.mxu0
    %591 = vrot.lane.b32.xlu0 %v205, 96
    %v592 = vpop.permute.xlu0 %591
    %v593 = vsel %vm212, %v205, 0
    %v595 = vsel %vm212, %v592, 0
    %597 = vmatprep.subr.mxu0 0.0
    %598 = vmatpush1.xpose.msra.mxu0 %v595
    %599 = vmatprep.subr.mxu0 0.0
    %600 = vmatpush1.xpose.msra.mxu0 0.0
    %601 = vmatprep.subr.mxu0 0.0
    %602 = vmatpush1.xpose.msra.mxu0 0.0
    %603 = vmatprep.subr.mxu0 0.0
    %604 = vmatpush1.xpose.msra.mxu0 0.0
    %605 = vmatprep.subr.mxu0 0.0
    %606 = vmatpush1.xpose.msra.mxu0 0.0
    %607 = vmatprep.subr.mxu0 0.0
    %608 = vmatpush1.xpose.msra.mxu0 0.0
    %609 = vmatprep.subr.mxu0 0.0
    %610 = vmatpush1.xpose.msra.mxu0 0.0
    %611 = vmatprep.subr.mxu0 0.0
    %612 = vmatpush1.xpose.msra.mxu0 0.0
    %613 = vmatprep.subr.mxu0 0.0
    %614 = vmatpush1.xpose.msra.mxu0 0.0
    %615 = vmatprep.subr.mxu0 0.0
    %616 = vmatpush1.xpose.msra.mxu0 0.0
    %617 = vmatprep.subr.mxu0 0.0
    %618 = vmatpush1.xpose.msra.mxu0 0.0
    %619 = vmatprep.subr.mxu0 0.0
    %620 = vmatpush1.xpose.msra.mxu0 0.0
    %621 = vmatprep.subr.mxu0 0.0
    %622 = vmatpush1.xpose.msra.mxu0 0.0
    %623 = vmatprep.subr.mxu0 0.0
    %624 = vmatpush1.xpose.msra.mxu0 0.0
    %625 = vmatprep.subr.mxu0 0.0
    %626 = vmatpush1.xpose.msra.mxu0 0.0
    %627 = vmatprep.subr.mxu0 0.0
    %628 = vmatpush1.xpose.msra.mxu0 0.0
    %629 = vmatprep.subr.mxu0 0.0
    %630 = vmatpush1.xpose.msra.mxu0 0.0
    %631 = vmatprep.subr.mxu0 0.0
    %632 = vmatpush1.xpose.msra.mxu0 0.0
    %633 = vmatprep.subr.mxu0 0.0
    %634 = vmatpush1.xpose.msra.mxu0 0.0
    %635 = vmatprep.subr.mxu0 0.0
    %636 = vmatpush1.xpose.msra.mxu0 0.0
    %637 = vmatprep.subr.mxu0 0.0
    %638 = vmatpush1.xpose.msra.mxu0 0.0
    %639 = vmatprep.subr.mxu0 0.0
    %640 = vmatpush1.xpose.msra.mxu0 0.0
    %641 = vmatprep.subr.mxu0 0.0
    %642 = vmatpush1.xpose.msra.mxu0 0.0
    %643 = vmatprep.subr.mxu0 0.0
    %644 = vmatpush1.xpose.msra.mxu0 0.0
    %645 = vmatprep.subr.mxu0 0.0
    %646 = vmatpush1.xpose.msra.mxu0 0.0
    %647 = vmatprep.subr.mxu0 0.0
    %648 = vmatpush1.xpose.msra.mxu0 0.0
    %649 = vmatprep.subr.mxu0 0.0
    %650 = vmatpush1.xpose.msra.mxu0 0.0
    %651 = vmatprep.subr.mxu0 0.0
    %652 = vmatpush1.xpose.msra.mxu0 0.0
    %653 = vmatprep.subr.mxu0 0.0
    %654 = vmatpush1.xpose.msra.mxu0 0.0
    %655 = vmatprep.subr.mxu0 0.0
    %656 = vmatpush1.xpose.msra.mxu0 0.0
    %657 = vmatprep.subr.mxu0 0.0
    %658 = vmatpush1.xpose.msra.mxu0 0.0
    %659 = vmatprep.subr.mxu0 0.0
    %660 = vmatpush1.xpose.msra.mxu0 0.0
    %661 = vmatprep.mubr.f32.mxu0 0.0
    %662 = vmatmul.mubr.f32.gmra.mrb[0].mxu0 %v593
    %v663 = vpop.f32.mrb[0].mxu0
    %v664 = vadd.f32 0.0, %v663
    %v665 = vpop.f32.mrb[0].mxu0
    %666 = vdwg.mxu0
    %667 = vrot.lane.b32.xlu0 %v207, 96
    %v668 = vpop.permute.xlu0 %667
    %v669 = vsel %vm212, %v207, 0
    %v671 = vsel %vm212, %v668, 0
    %673 = vmatprep.subr.mxu0 0.0
    %674 = vmatpush1.xpose.msra.mxu0 %v671
    %675 = vmatprep.subr.mxu0 0.0
    %676 = vmatpush1.xpose.msra.mxu0 0.0
    %677 = vmatprep.subr.mxu0 0.0
    %678 = vmatpush1.xpose.msra.mxu0 0.0
    %679 = vmatprep.subr.mxu0 0.0
    %680 = vmatpush1.xpose.msra.mxu0 0.0
    %681 = vmatprep.subr.mxu0 0.0
    %682 = vmatpush1.xpose.msra.mxu0 0.0
    %683 = vmatprep.subr.mxu0 0.0
    %684 = vmatpush1.xpose.msra.mxu0 0.0
    %685 = vmatprep.subr.mxu0 0.0
    %686 = vmatpush1.xpose.msra.mxu0 0.0
    %687 = vmatprep.subr.mxu0 0.0
    %688 = vmatpush1.xpose.msra.mxu0 0.0
    %689 = vmatprep.subr.mxu0 0.0
    %690 = vmatpush1.xpose.msra.mxu0 0.0
    %691 = vmatprep.subr.mxu0 0.0
    %692 = vmatpush1.xpose.msra.mxu0 0.0
    %693 = vmatprep.subr.mxu0 0.0
    %694 = vmatpush1.xpose.msra.mxu0 0.0
    %695 = vmatprep.subr.mxu0 0.0
    %696 = vmatpush1.xpose.msra.mxu0 0.0
    %697 = vmatprep.subr.mxu0 0.0
    %698 = vmatpush1.xpose.msra.mxu0 0.0
    %699 = vmatprep.subr.mxu0 0.0
    %700 = vmatpush1.xpose.msra.mxu0 0.0
    %701 = vmatprep.subr.mxu0 0.0
    %702 = vmatpush1.xpose.msra.mxu0 0.0
    %703 = vmatprep.subr.mxu0 0.0
    %704 = vmatpush1.xpose.msra.mxu0 0.0
    %705 = vmatprep.subr.mxu0 0.0
    %706 = vmatpush1.xpose.msra.mxu0 0.0
    %707 = vmatprep.subr.mxu0 0.0
    %708 = vmatpush1.xpose.msra.mxu0 0.0
    %709 = vmatprep.subr.mxu0 0.0
    %710 = vmatpush1.xpose.msra.mxu0 0.0
    %711 = vmatprep.subr.mxu0 0.0
    %712 = vmatpush1.xpose.msra.mxu0 0.0
    %713 = vmatprep.subr.mxu0 0.0
    %714 = vmatpush1.xpose.msra.mxu0 0.0
    %715 = vmatprep.subr.mxu0 0.0
    %716 = vmatpush1.xpose.msra.mxu0 0.0
    %717 = vmatprep.subr.mxu0 0.0
    %718 = vmatpush1.xpose.msra.mxu0 0.0
    %719 = vmatprep.subr.mxu0 0.0
    %720 = vmatpush1.xpose.msra.mxu0 0.0
    %721 = vmatprep.subr.mxu0 0.0
    %722 = vmatpush1.xpose.msra.mxu0 0.0
    %723 = vmatprep.subr.mxu0 0.0
    %724 = vmatpush1.xpose.msra.mxu0 0.0
    %725 = vmatprep.subr.mxu0 0.0
    %726 = vmatpush1.xpose.msra.mxu0 0.0
    %727 = vmatprep.subr.mxu0 0.0
    %728 = vmatpush1.xpose.msra.mxu0 0.0
    %729 = vmatprep.subr.mxu0 0.0
    %730 = vmatpush1.xpose.msra.mxu0 0.0
    %731 = vmatprep.subr.mxu0 0.0
    %732 = vmatpush1.xpose.msra.mxu0 0.0
    %733 = vmatprep.subr.mxu0 0.0
    %734 = vmatpush1.xpose.msra.mxu0 0.0
    %735 = vmatprep.subr.mxu0 0.0
    %736 = vmatpush1.xpose.msra.mxu0 0.0
    %737 = vmatprep.mubr.f32.mxu0 0.0
    %738 = vmatmul.mubr.f32.gmra.mrb[0].mxu0 %v669
    %v739 = vpop.f32.mrb[0].mxu0
    %v740 = vadd.f32 0.0, %v739
    %v741 = vpop.f32.mrb[0].mxu0
    %742 = vdwg.mxu0
    %743 = vrot.lane.b32.xlu0 %v209, 96
    %v744 = vpop.permute.xlu0 %743
    %v745 = vsel %vm212, %v209, 0
    %v747 = vsel %vm212, %v744, 0
    %749 = vmatprep.subr.mxu0 0.0
    %750 = vmatpush1.xpose.msra.mxu0 %v747
    %751 = vmatprep.subr.mxu0 0.0
    %752 = vmatpush1.xpose.msra.mxu0 0.0
    %753 = vmatprep.subr.mxu0 0.0
    %754 = vmatpush1.xpose.msra.mxu0 0.0
    %755 = vmatprep.subr.mxu0 0.0
    %756 = vmatpush1.xpose.msra.mxu0 0.0
    %757 = vmatprep.subr.mxu0 0.0
    %758 = vmatpush1.xpose.msra.mxu0 0.0
    %759 = vmatprep.subr.mxu0 0.0
    %760 = vmatpush1.xpose.msra.mxu0 0.0
    %761 = vmatprep.subr.mxu0 0.0
    %762 = vmatpush1.xpose.msra.mxu0 0.0
    %763 = vmatprep.subr.mxu0 0.0
    %764 = vmatpush1.xpose.msra.mxu0 0.0
    %765 = vmatprep.subr.mxu0 0.0
    %766 = vmatpush1.xpose.msra.mxu0 0.0
    %767 = vmatprep.subr.mxu0 0.0
    %768 = vmatpush1.xpose.msra.mxu0 0.0
    %769 = vmatprep.subr.mxu0 0.0
    %770 = vmatpush1.xpose.msra.mxu0 0.0
    %771 = vmatprep.subr.mxu0 0.0
    %772 = vmatpush1.xpose.msra.mxu0 0.0
    %773 = vmatprep.subr.mxu0 0.0
    %774 = vmatpush1.xpose.msra.mxu0 0.0
    %775 = vmatprep.subr.mxu0 0.0
    %776 = vmatpush1.xpose.msra.mxu0 0.0
    %777 = vmatprep.subr.mxu0 0.0
    %778 = vmatpush1.xpose.msra.mxu0 0.0
    %779 = vmatprep.subr.mxu0 0.0
    %780 = vmatpush1.xpose.msra.mxu0 0.0
    %781 = vmatprep.subr.mxu0 0.0
    %782 = vmatpush1.xpose.msra.mxu0 0.0
    %783 = vmatprep.subr.mxu0 0.0
    %784 = vmatpush1.xpose.msra.mxu0 0.0
    %785 = vmatprep.subr.mxu0 0.0
    %786 = vmatpush1.xpose.msra.mxu0 0.0
    %787 = vmatprep.subr.mxu0 0.0
    %788 = vmatpush1.xpose.msra.mxu0 0.0
    %789 = vmatprep.subr.mxu0 0.0
    %790 = vmatpush1.xpose.msra.mxu0 0.0
    %791 = vmatprep.subr.mxu0 0.0
    %792 = vmatpush1.xpose.msra.mxu0 0.0
    %793 = vmatprep.subr.mxu0 0.0
    %794 = vmatpush1.xpose.msra.mxu0 0.0
    %795 = vmatprep.subr.mxu0 0.0
    %796 = vmatpush1.xpose.msra.mxu0 0.0
    %797 = vmatprep.subr.mxu0 0.0
    %798 = vmatpush1.xpose.msra.mxu0 0.0
    %799 = vmatprep.subr.mxu0 0.0
    %800 = vmatpush1.xpose.msra.mxu0 0.0
    %801 = vmatprep.subr.mxu0 0.0
    %802 = vmatpush1.xpose.msra.mxu0 0.0
    %803 = vmatprep.subr.mxu0 0.0
    %804 = vmatpush1.xpose.msra.mxu0 0.0
    %805 = vmatprep.subr.mxu0 0.0
    %806 = vmatpush1.xpose.msra.mxu0 0.0
    %807 = vmatprep.subr.mxu0 0.0
    %808 = vmatpush1.xpose.msra.mxu0 0.0
    %809 = vmatprep.subr.mxu0 0.0
    %810 = vmatpush1.xpose.msra.mxu0 0.0
    %811 = vmatprep.subr.mxu0 0.0
    %812 = vmatpush1.xpose.msra.mxu0 0.0
    %813 = vmatprep.mubr.f32.mxu0 0.0
    %814 = vmatmul.mubr.f32.gmra.mrb[0].mxu0 %v745
    %v815 = vpop.f32.mrb[0].mxu0
    %v816 = vadd.f32 0.0, %v815
    %v817 = vpop.f32.mrb[0].mxu0
    %818 = vdwg.mxu0
    %v819 = vmul.f32 %v284, 0.35355338
    %v820 = vmul.f32 %v360, 0.35355338
    %v821 = vmul.f32 %v436, 0.35355338
    %v822 = vmul.f32 %v512, 0.35355338
    %v823 = vmul.f32 %v588, 0.35355338
    %v824 = vmul.f32 %v664, 0.35355338
    %v825 = vmul.f32 %v740, 0.35355338
    %v826 = vmul.f32 %v816, 0.35355338
    %v827 = vadd.f32 %v50, %v819
    %v828 = vadd.f32 %v51, %v820
    %v829 = vadd.f32 %v52, %v821
    %v830 = vadd.f32 %v53, %v822
    %v831 = vadd.f32 %v54, %v823
    %v832 = vadd.f32 %v55, %v824
    %v833 = vadd.f32 %v56, %v825
    %v834 = vadd.f32 %v57, %v826
    %v835 = vsel %vm212, %v827, -inf
    %836 = vmax.xlane.f32.xlu0 %v835
    %v837 = vpop.xlane.xlu0 %836
    %v838 = vsel %vm212, %v828, -inf
    %839 = vmax.xlane.f32.xlu0 %v838
    %v840 = vpop.xlane.xlu0 %839
    %v841 = vsel %vm212, %v829, -inf
    %842 = vmax.xlane.f32.xlu0 %v841
    %v843 = vpop.xlane.xlu0 %842
    %v844 = vsel %vm212, %v830, -inf
    %845 = vmax.xlane.f32.xlu0 %v844
    %v846 = vpop.xlane.xlu0 %845
    %v847 = vsel %vm212, %v831, -inf
    %848 = vmax.xlane.f32.xlu0 %v847
    %v849 = vpop.xlane.xlu0 %848
    %v850 = vsel %vm212, %v832, -inf
    %851 = vmax.xlane.f32.xlu0 %v850
    %v852 = vpop.xlane.xlu0 %851
    %v853 = vsel %vm212, %v833, -inf
    %854 = vmax.xlane.f32.xlu0 %v853
    %v855 = vpop.xlane.xlu0 %854
    %v856 = vsel %vm212, %v834, -inf
    %857 = vmax.xlane.f32.xlu0 %v856
    %v858 = vpop.xlane.xlu0 %857
    %v859 = vsub.f32 %v827, %v837
    %v860 = vsub.f32 %v828, %v840
    %v861 = vsub.f32 %v829, %v843
    %v862 = vsub.f32 %v830, %v846
    %v863 = vsub.f32 %v831, %v849
    %v864 = vsub.f32 %v832, %v852
    %v865 = vsub.f32 %v833, %v855
    %v866 = vsub.f32 %v834, %v858
    %v867 = vmul.f32 %v859, 1.442695
    %v868 = vpow.pop %v867
    %v869 = vmul.f32 %v860, 1.442695
    %v870 = vpow.pop %v869
    %v871 = vmul.f32 %v861, 1.442695
    %v872 = vpow.pop %v871
    %v873 = vmul.f32 %v862, 1.442695
    %v874 = vpow.pop %v873
    %v875 = vmul.f32 %v863, 1.442695
    %v876 = vpow.pop %v875
    %v877 = vmul.f32 %v864, 1.442695
    %v878 = vpow.pop %v877
    %v879 = vmul.f32 %v865, 1.442695
    %v880 = vpow.pop %v879
    %v881 = vmul.f32 %v866, 1.442695
    %v882 = vpow.pop %v881
    %v883 = vsel %vm212, %v868, 0.0
    %884 = vadd.xlane.f32.xlu0 %v883
    %v885 = vpop.xlane.xlu0 %884
    %v886 = vsel %vm212, %v870, 0.0
    %887 = vadd.xlane.f32.xlu0 %v886
    %v888 = vpop.xlane.xlu0 %887
    %v889 = vsel %vm212, %v872, 0.0
    %890 = vadd.xlane.f32.xlu0 %v889
    %v891 = vpop.xlane.xlu0 %890
    %v892 = vsel %vm212, %v874, 0.0
    %893 = vadd.xlane.f32.xlu0 %v892
    %v894 = vpop.xlane.xlu0 %893
    %v895 = vsel %vm212, %v876, 0.0
    %896 = vadd.xlane.f32.xlu0 %v895
    %v897 = vpop.xlane.xlu0 %896
    %v898 = vsel %vm212, %v878, 0.0
    %899 = vadd.xlane.f32.xlu0 %v898
    %v900 = vpop.xlane.xlu0 %899
    %v901 = vsel %vm212, %v880, 0.0
    %902 = vadd.xlane.f32.xlu0 %v901
    %v903 = vpop.xlane.xlu0 %902
    %v904 = vsel %vm212, %v882, 0.0
    %905 = vadd.xlane.f32.xlu0 %v904
    %v906 = vpop.xlane.xlu0 %905
    %v907 = vrcp.pop %v885
    %v908 = vrcp.pop %v888
    %v909 = vrcp.pop %v891
    %v910 = vrcp.pop %v894
    %v911 = vrcp.pop %v897
    %v912 = vrcp.pop %v900
    %v913 = vrcp.pop %v903
    %v914 = vrcp.pop %v906
    %v915 = vmul.f32 %v868, %v907
    %v916 = vmul.f32 %v870, %v908
    %v917 = vmul.f32 %v872, %v909
    %v918 = vmul.f32 %v874, %v910
    %v919 = vmul.f32 %v876, %v911
    %v920 = vmul.f32 %v878, %v912
    %v921 = vmul.f32 %v880, %v913
    %v922 = vmul.f32 %v882, %v914
    %923 = vrot.lane.b32.xlu0 %v188, 64
    %v924 = vpop.permute.xlu0 %923
    %v927 = vsel %vm212, %v915, 0
    %929 = vmatprep.subr.mxu0 0.0
    %930 = vmatpush1.msra.mxu0 %v924
    %931 = vmatprep.subr.mxu0 0.0
    %932 = vmatpush1.msra.mxu0 0.0
    %933 = vmatprep.subr.mxu0 0.0
    %934 = vmatpush1.msra.mxu0 0.0
    %935 = vmatprep.subr.mxu0 0.0
    %936 = vmatpush1.msra.mxu0 0.0
    %937 = vmatprep.subr.mxu0 0.0
    %938 = vmatpush1.msra.mxu0 0.0
    %939 = vmatprep.subr.mxu0 0.0
    %940 = vmatpush1.msra.mxu0 0.0
    %941 = vmatprep.subr.mxu0 0.0
    %942 = vmatpush1.msra.mxu0 0.0
    %943 = vmatprep.subr.mxu0 0.0
    %944 = vmatpush1.msra.mxu0 0.0
    %945 = vmatprep.subr.mxu0 0.0
    %946 = vmatpush1.msra.mxu0 0.0
    %947 = vmatprep.subr.mxu0 0.0
    %948 = vmatpush1.msra.mxu0 0.0
    %949 = vmatprep.subr.mxu0 0.0
    %950 = vmatpush1.msra.mxu0 0.0
    %951 = vmatprep.subr.mxu0 0.0
    %952 = vmatpush1.msra.mxu0 0.0
    %953 = vmatprep.subr.mxu0 0.0
    %954 = vmatpush1.msra.mxu0 0.0
    %955 = vmatprep.subr.mxu0 0.0
    %956 = vmatpush1.msra.mxu0 0.0
    %957 = vmatprep.subr.mxu0 0.0
    %958 = vmatpush1.msra.mxu0 0.0
    %959 = vmatprep.subr.mxu0 0.0
    %960 = vmatpush1.msra.mxu0 0.0
    %961 = vmatprep.subr.mxu0 0.0
    %962 = vmatpush1.msra.mxu0 0.0
    %963 = vmatprep.subr.mxu0 0.0
    %964 = vmatpush1.msra.mxu0 0.0
    %965 = vmatprep.subr.mxu0 0.0
    %966 = vmatpush1.msra.mxu0 0.0
    %967 = vmatprep.subr.mxu0 0.0
    %968 = vmatpush1.msra.mxu0 0.0
    %969 = vmatprep.subr.mxu0 0.0
    %970 = vmatpush1.msra.mxu0 0.0
    %971 = vmatprep.subr.mxu0 0.0
    %972 = vmatpush1.msra.mxu0 0.0
    %973 = vmatprep.subr.mxu0 0.0
    %974 = vmatpush1.msra.mxu0 0.0
    %975 = vmatprep.subr.mxu0 0.0
    %976 = vmatpush1.msra.mxu0 0.0
    %977 = vmatprep.subr.mxu0 0.0
    %978 = vmatpush1.msra.mxu0 0.0
    %979 = vmatprep.subr.mxu0 0.0
    %980 = vmatpush1.msra.mxu0 0.0
    %981 = vmatprep.subr.mxu0 0.0
    %982 = vmatpush1.msra.mxu0 0.0
    %983 = vmatprep.subr.mxu0 0.0
    %984 = vmatpush1.msra.mxu0 0.0
    %985 = vmatprep.subr.mxu0 0.0
    %986 = vmatpush1.msra.mxu0 0.0
    %987 = vmatprep.subr.mxu0 0.0
    %988 = vmatpush1.msra.mxu0 0.0
    %989 = vmatprep.subr.mxu0 0.0
    %990 = vmatpush1.msra.mxu0 0.0
    %991 = vmatprep.subr.mxu0 0.0
    %992 = vmatpush1.msra.mxu0 0.0
    %993 = vmatprep.mubr.f32.mxu0 0.0
    %994 = vmatmul.mubr.f32.gmra.mrb[0].mxu0 %v927
    %v995 = vpop.f32.mrb[0].mxu0
    %v996 = vadd.f32 0.0, %v995
    %v997 = vpop.f32.mrb[0].mxu0
    %998 = vdwg.mxu0
    %999 = vrot.lane.b32.xlu0 %v198, 64
    %v1000 = vpop.permute.xlu0 %999
    %v1003 = vsel %vm212, %v916, 0
    %1005 = vmatprep.subr.mxu0 0.0
    %1006 = vmatpush1.msra.mxu0 %v1000
    %1007 = vmatprep.subr.mxu0 0.0
    %1008 = vmatpush1.msra.mxu0 0.0
    %1009 = vmatprep.subr.mxu0 0.0
    %1010 = vmatpush1.msra.mxu0 0.0
    %1011 = vmatprep.subr.mxu0 0.0
    %1012 = vmatpush1.msra.mxu0 0.0
    %1013 = vmatprep.subr.mxu0 0.0
    %1014 = vmatpush1.msra.mxu0 0.0
    %1015 = vmatprep.subr.mxu0 0.0
    %1016 = vmatpush1.msra.mxu0 0.0
    %1017 = vmatprep.subr.mxu0 0.0
    %1018 = vmatpush1.msra.mxu0 0.0
    %1019 = vmatprep.subr.mxu0 0.0
    %1020 = vmatpush1.msra.mxu0 0.0
    %1021 = vmatprep.subr.mxu0 0.0
    %1022 = vmatpush1.msra.mxu0 0.0
    %1023 = vmatprep.subr.mxu0 0.0
    %1024 = vmatpush1.msra.mxu0 0.0
    %1025 = vmatprep.subr.mxu0 0.0
    %1026 = vmatpush1.msra.mxu0 0.0
    %1027 = vmatprep.subr.mxu0 0.0
    %1028 = vmatpush1.msra.mxu0 0.0
    %1029 = vmatprep.subr.mxu0 0.0
    %1030 = vmatpush1.msra.mxu0 0.0
    %1031 = vmatprep.subr.mxu0 0.0
    %1032 = vmatpush1.msra.mxu0 0.0
    %1033 = vmatprep.subr.mxu0 0.0
    %1034 = vmatpush1.msra.mxu0 0.0
    %1035 = vmatprep.subr.mxu0 0.0
    %1036 = vmatpush1.msra.mxu0 0.0
    %1037 = vmatprep.subr.mxu0 0.0
    %1038 = vmatpush1.msra.mxu0 0.0
    %1039 = vmatprep.subr.mxu0 0.0
    %1040 = vmatpush1.msra.mxu0 0.0
    %1041 = vmatprep.subr.mxu0 0.0
    %1042 = vmatpush1.msra.mxu0 0.0
    %1043 = vmatprep.subr.mxu0 0.0
    %1044 = vmatpush1.msra.mxu0 0.0
    %1045 = vmatprep.subr.mxu0 0.0
    %1046 = vmatpush1.msra.mxu0 0.0
    %1047 = vmatprep.subr.mxu0 0.0
    %1048 = vmatpush1.msra.mxu0 0.0
    %1049 = vmatprep.subr.mxu0 0.0
    %1050 = vmatpush1.msra.mxu0 0.0
    %1051 = vmatprep.subr.mxu0 0.0
    %1052 = vmatpush1.msra.mxu0 0.0
    %1053 = vmatprep.subr.mxu0 0.0
    %1054 = vmatpush1.msra.mxu0 0.0
    %1055 = vmatprep.subr.mxu0 0.0
    %1056 = vmatpush1.msra.mxu0 0.0
    %1057 = vmatprep.subr.mxu0 0.0
    %1058 = vmatpush1.msra.mxu0 0.0
    %1059 = vmatprep.subr.mxu0 0.0
    %1060 = vmatpush1.msra.mxu0 0.0
    %1061 = vmatprep.subr.mxu0 0.0
    %1062 = vmatpush1.msra.mxu0 0.0
    %1063 = vmatprep.subr.mxu0 0.0
    %1064 = vmatpush1.msra.mxu0 0.0
    %1065 = vmatprep.subr.mxu0 0.0
    %1066 = vmatpush1.msra.mxu0 0.0
    %1067 = vmatprep.subr.mxu0 0.0
    %1068 = vmatpush1.msra.mxu0 0.0
    %1069 = vmatprep.mubr.f32.mxu0 0.0
    %1070 = vmatmul.mubr.f32.gmra.mrb[0].mxu0 %v1003
    %v1071 = vpop.f32.mrb[0].mxu0
    %v1072 = vadd.f32 0.0, %v1071
    %v1073 = vpop.f32.mrb[0].mxu0
    %1074 = vdwg.mxu0
    %1075 = vrot.lane.b32.xlu0 %v200, 64
    %v1076 = vpop.permute.xlu0 %1075
    %v1079 = vsel %vm212, %v917, 0
    %1081 = vmatprep.subr.mxu0 0.0
    %1082 = vmatpush1.msra.mxu0 %v1076
    %1083 = vmatprep.subr.mxu0 0.0
    %1084 = vmatpush1.msra.mxu0 0.0
    %1085 = vmatprep.subr.mxu0 0.0
    %1086 = vmatpush1.msra.mxu0 0.0
    %1087 = vmatprep.subr.mxu0 0.0
    %1088 = vmatpush1.msra.mxu0 0.0
    %1089 = vmatprep.subr.mxu0 0.0
    %1090 = vmatpush1.msra.mxu0 0.0
    %1091 = vmatprep.subr.mxu0 0.0
    %1092 = vmatpush1.msra.mxu0 0.0
    %1093 = vmatprep.subr.mxu0 0.0
    %1094 = vmatpush1.msra.mxu0 0.0
    %1095 = vmatprep.subr.mxu0 0.0
    %1096 = vmatpush1.msra.mxu0 0.0
    %1097 = vmatprep.subr.mxu0 0.0
    %1098 = vmatpush1.msra.mxu0 0.0
    %1099 = vmatprep.subr.mxu0 0.0
    %1100 = vmatpush1.msra.mxu0 0.0
    %1101 = vmatprep.subr.mxu0 0.0
    %1102 = vmatpush1.msra.mxu0 0.0
    %1103 = vmatprep.subr.mxu0 0.0
    %1104 = vmatpush1.msra.mxu0 0.0
    %1105 = vmatprep.subr.mxu0 0.0
    %1106 = vmatpush1.msra.mxu0 0.0
    %1107 = vmatprep.subr.mxu0 0.0
    %1108 = vmatpush1.msra.mxu0 0.0
    %1109 = vmatprep.subr.mxu0 0.0
    %1110 = vmatpush1.msra.mxu0 0.0
    %1111 = vmatprep.subr.mxu0 0.0
    %1112 = vmatpush1.msra.mxu0 0.0
    %1113 = vmatprep.subr.mxu0 0.0
    %1114 = vmatpush1.msra.mxu0 0.0
    %1115 = vmatprep.subr.mxu0 0.0
    %1116 = vmatpush1.msra.mxu0 0.0
    %1117 = vmatprep.subr.mxu0 0.0
    %1118 = vmatpush1.msra.mxu0 0.0
    %1119 = vmatprep.subr.mxu0 0.0
    %1120 = vmatpush1.msra.mxu0 0.0
    %1121 = vmatprep.subr.mxu0 0.0
    %1122 = vmatpush1.msra.mxu0 0.0
    %1123 = vmatprep.subr.mxu0 0.0
    %1124 = vmatpush1.msra.mxu0 0.0
    %1125 = vmatprep.subr.mxu0 0.0
    %1126 = vmatpush1.msra.mxu0 0.0
    %1127 = vmatprep.subr.mxu0 0.0
    %1128 = vmatpush1.msra.mxu0 0.0
    %1129 = vmatprep.subr.mxu0 0.0
    %1130 = vmatpush1.msra.mxu0 0.0
    %1131 = vmatprep.subr.mxu0 0.0
    %1132 = vmatpush1.msra.mxu0 0.0
    %1133 = vmatprep.subr.mxu0 0.0
    %1134 = vmatpush1.msra.mxu0 0.0
    %1135 = vmatprep.subr.mxu0 0.0
    %1136 = vmatpush1.msra.mxu0 0.0
    %1137 = vmatprep.subr.mxu0 0.0
    %1138 = vmatpush1.msra.mxu0 0.0
    %1139 = vmatprep.subr.mxu0 0.0
    %1140 = vmatpush1.msra.mxu0 0.0
    %1141 = vmatprep.subr.mxu0 0.0
    %1142 = vmatpush1.msra.mxu0 0.0
    %1143 = vmatprep.subr.mxu0 0.0
    %1144 = vmatpush1.msra.mxu0 0.0
    %1145 = vmatprep.mubr.f32.mxu0 0.0
    %1146 = vmatmul.mubr.f32.gmra.mrb[0].mxu0 %v1079
    %v1147 = vpop.f32.mrb[0].mxu0
    %v1148 = vadd.f32 0.0, %v1147
    %v1149 = vpop.f32.mrb[0].mxu0
    %1150 = vdwg.mxu0
    %1151 = vrot.lane.b32.xlu0 %v202, 64
    %v1152 = vpop.permute.xlu0 %1151
    %v1155 = vsel %vm212, %v918, 0
    %1157 = vmatprep.subr.mxu0 0.0
    %1158 = vmatpush1.msra.mxu0 %v1152
    %1159 = vmatprep.subr.mxu0 0.0
    %1160 = vmatpush1.msra.mxu0 0.0
    %1161 = vmatprep.subr.mxu0 0.0
    %1162 = vmatpush1.msra.mxu0 0.0
    %1163 = vmatprep.subr.mxu0 0.0
    %1164 = vmatpush1.msra.mxu0 0.0
    %1165 = vmatprep.subr.mxu0 0.0
    %1166 = vmatpush1.msra.mxu0 0.0
    %1167 = vmatprep.subr.mxu0 0.0
    %1168 = vmatpush1.msra.mxu0 0.0
    %1169 = vmatprep.subr.mxu0 0.0
    %1170 = vmatpush1.msra.mxu0 0.0
    %1171 = vmatprep.subr.mxu0 0.0
    %1172 = vmatpush1.msra.mxu0 0.0
    %1173 = vmatprep.subr.mxu0 0.0
    %1174 = vmatpush1.msra.mxu0 0.0
    %1175 = vmatprep.subr.mxu0 0.0
    %1176 = vmatpush1.msra.mxu0 0.0
    %1177 = vmatprep.subr.mxu0 0.0
    %1178 = vmatpush1.msra.mxu0 0.0
    %1179 = vmatprep.subr.mxu0 0.0
    %1180 = vmatpush1.msra.mxu0 0.0
    %1181 = vmatprep.subr.mxu0 0.0
    %1182 = vmatpush1.msra.mxu0 0.0
    %1183 = vmatprep.subr.mxu0 0.0
    %1184 = vmatpush1.msra.mxu0 0.0
    %1185 = vmatprep.subr.mxu0 0.0
    %1186 = vmatpush1.msra.mxu0 0.0
    %1187 = vmatprep.subr.mxu0 0.0
    %1188 = vmatpush1.msra.mxu0 0.0
    %1189 = vmatprep.subr.mxu0 0.0
    %1190 = vmatpush1.msra.mxu0 0.0
    %1191 = vmatprep.subr.mxu0 0.0
    %1192 = vmatpush1.msra.mxu0 0.0
    %1193 = vmatprep.subr.mxu0 0.0
    %1194 = vmatpush1.msra.mxu0 0.0
    %1195 = vmatprep.subr.mxu0 0.0
    %1196 = vmatpush1.msra.mxu0 0.0
    %1197 = vmatprep.subr.mxu0 0.0
    %1198 = vmatpush1.msra.mxu0 0.0
    %1199 = vmatprep.subr.mxu0 0.0
    %1200 = vmatpush1.msra.mxu0 0.0
    %1201 = vmatprep.subr.mxu0 0.0
    %1202 = vmatpush1.msra.mxu0 0.0
    %1203 = vmatprep.subr.mxu0 0.0
    %1204 = vmatpush1.msra.mxu0 0.0
    %1205 = vmatprep.subr.mxu0 0.0
    %1206 = vmatpush1.msra.mxu0 0.0
    %1207 = vmatprep.subr.mxu0 0.0
    %1208 = vmatpush1.msra.mxu0 0.0
    %1209 = vmatprep.subr.mxu0 0.0
    %1210 = vmatpush1.msra.mxu0 0.0
    %1211 = vmatprep.subr.mxu0 0.0
    %1212 = vmatpush1.msra.mxu0 0.0
    %1213 = vmatprep.subr.mxu0 0.0
    %1214 = vmatpush1.msra.mxu0 0.0
    %1215 = vmatprep.subr.mxu0 0.0
    %1216 = vmatpush1.msra.mxu0 0.0
    %1217 = vmatprep.subr.mxu0 0.0
    %1218 = vmatpush1.msra.mxu0 0.0
    %1219 = vmatprep.subr.mxu0 0.0
    %1220 = vmatpush1.msra.mxu0 0.0
    %1221 = vmatprep.mubr.f32.mxu0 0.0
    %1222 = vmatmul.mubr.f32.gmra.mrb[0].mxu0 %v1155
    %v1223 = vpop.f32.mrb[0].mxu0
    %v1224 = vadd.f32 0.0, %v1223
    %v1225 = vpop.f32.mrb[0].mxu0
    %1226 = vdwg.mxu0
    %1227 = vrot.lane.b32.xlu0 %v193, 64
    %v1228 = vpop.permute.xlu0 %1227
    %v1231 = vsel %vm212, %v919, 0
    %1233 = vmatprep.subr.mxu0 0.0
    %1234 = vmatpush1.msra.mxu0 %v1228
    %1235 = vmatprep.subr.mxu0 0.0
    %1236 = vmatpush1.msra.mxu0 0.0
    %1237 = vmatprep.subr.mxu0 0.0
    %1238 = vmatpush1.msra.mxu0 0.0
    %1239 = vmatprep.subr.mxu0 0.0
    %1240 = vmatpush1.msra.mxu0 0.0
    %1241 = vmatprep.subr.mxu0 0.0
    %1242 = vmatpush1.msra.mxu0 0.0
    %1243 = vmatprep.subr.mxu0 0.0
    %1244 = vmatpush1.msra.mxu0 0.0
    %1245 = vmatprep.subr.mxu0 0.0
    %1246 = vmatpush1.msra.mxu0 0.0
    %1247 = vmatprep.subr.mxu0 0.0
    %1248 = vmatpush1.msra.mxu0 0.0
    %1249 = vmatprep.subr.mxu0 0.0
    %1250 = vmatpush1.msra.mxu0 0.0
    %1251 = vmatprep.subr.mxu0 0.0
    %1252 = vmatpush1.msra.mxu0 0.0
    %1253 = vmatprep.subr.mxu0 0.0
    %1254 = vmatpush1.msra.mxu0 0.0
    %1255 = vmatprep.subr.mxu0 0.0
    %1256 = vmatpush1.msra.mxu0 0.0
    %1257 = vmatprep.subr.mxu0 0.0
    %1258 = vmatpush1.msra.mxu0 0.0
    %1259 = vmatprep.subr.mxu0 0.0
    %1260 = vmatpush1.msra.mxu0 0.0
    %1261 = vmatprep.subr.mxu0 0.0
    %1262 = vmatpush1.msra.mxu0 0.0
    %1263 = vmatprep.subr.mxu0 0.0
    %1264 = vmatpush1.msra.mxu0 0.0
    %1265 = vmatprep.subr.mxu0 0.0
    %1266 = vmatpush1.msra.mxu0 0.0
    %1267 = vmatprep.subr.mxu0 0.0
    %1268 = vmatpush1.msra.mxu0 0.0
    %1269 = vmatprep.subr.mxu0 0.0
    %1270 = vmatpush1.msra.mxu0 0.0
    %1271 = vmatprep.subr.mxu0 0.0
    %1272 = vmatpush1.msra.mxu0 0.0
    %1273 = vmatprep.subr.mxu0 0.0
    %1274 = vmatpush1.msra.mxu0 0.0
    %1275 = vmatprep.subr.mxu0 0.0
    %1276 = vmatpush1.msra.mxu0 0.0
    %1277 = vmatprep.subr.mxu0 0.0
    %1278 = vmatpush1.msra.mxu0 0.0
    %1279 = vmatprep.subr.mxu0 0.0
    %1280 = vmatpush1.msra.mxu0 0.0
    %1281 = vmatprep.subr.mxu0 0.0
    %1282 = vmatpush1.msra.mxu0 0.0
    %1283 = vmatprep.subr.mxu0 0.0
    %1284 = vmatpush1.msra.mxu0 0.0
    %1285 = vmatprep.subr.mxu0 0.0
    %1286 = vmatpush1.msra.mxu0 0.0
    %1287 = vmatprep.subr.mxu0 0.0
    %1288 = vmatpush1.msra.mxu0 0.0
    %1289 = vmatprep.subr.mxu0 0.0
    %1290 = vmatpush1.msra.mxu0 0.0
    %1291 = vmatprep.subr.mxu0 0.0
    %1292 = vmatpush1.msra.mxu0 0.0
    %1293 = vmatprep.subr.mxu0 0.0
    %1294 = vmatpush1.msra.mxu0 0.0
    %1295 = vmatprep.subr.mxu0 0.0
    %1296 = vmatpush1.msra.mxu0 0.0
    %1297 = vmatprep.mubr.f32.mxu0 0.0
    %1298 = vmatmul.mubr.f32.gmra.mrb[0].mxu0 %v1231
    %v1299 = vpop.f32.mrb[0].mxu0
    %v1300 = vadd.f32 0.0, %v1299
    %v1301 = vpop.f32.mrb[0].mxu0
    %1302 = vdwg.mxu0
    %1303 = vrot.lane.b32.xlu0 %v205, 64
    %v1304 = vpop.permute.xlu0 %1303
    %v1307 = vsel %vm212, %v920, 0
    %1309 = vmatprep.subr.mxu0 0.0
    %1310 = vmatpush1.msra.mxu0 %v1304
    %1311 = vmatprep.subr.mxu0 0.0
    %1312 = vmatpush1.msra.mxu0 0.0
    %1313 = vmatprep.subr.mxu0 0.0
    %1314 = vmatpush1.msra.mxu0 0.0
    %1315 = vmatprep.subr.mxu0 0.0
    %1316 = vmatpush1.msra.mxu0 0.0
    %1317 = vmatprep.subr.mxu0 0.0
    %1318 = vmatpush1.msra.mxu0 0.0
    %1319 = vmatprep.subr.mxu0 0.0
    %1320 = vmatpush1.msra.mxu0 0.0
    %1321 = vmatprep.subr.mxu0 0.0
    %1322 = vmatpush1.msra.mxu0 0.0
    %1323 = vmatprep.subr.mxu0 0.0
    %1324 = vmatpush1.msra.mxu0 0.0
    %1325 = vmatprep.subr.mxu0 0.0
    %1326 = vmatpush1.msra.mxu0 0.0
    %1327 = vmatprep.subr.mxu0 0.0
    %1328 = vmatpush1.msra.mxu0 0.0
    %1329 = vmatprep.subr.mxu0 0.0
    %1330 = vmatpush1.msra.mxu0 0.0
    %1331 = vmatprep.subr.mxu0 0.0
    %1332 = vmatpush1.msra.mxu0 0.0
    %1333 = vmatprep.subr.mxu0 0.0
    %1334 = vmatpush1.msra.mxu0 0.0
    %1335 = vmatprep.subr.mxu0 0.0
    %1336 = vmatpush1.msra.mxu0 0.0
    %1337 = vmatprep.subr.mxu0 0.0
    %1338 = vmatpush1.msra.mxu0 0.0
    %1339 = vmatprep.subr.mxu0 0.0
    %1340 = vmatpush1.msra.mxu0 0.0
    %1341 = vmatprep.subr.mxu0 0.0
    %1342 = vmatpush1.msra.mxu0 0.0
    %1343 = vmatprep.subr.mxu0 0.0
    %1344 = vmatpush1.msra.mxu0 0.0
    %1345 = vmatprep.subr.mxu0 0.0
    %1346 = vmatpush1.msra.mxu0 0.0
    %1347 = vmatprep.subr.mxu0 0.0
    %1348 = vmatpush1.msra.mxu0 0.0
    %1349 = vmatprep.subr.mxu0 0.0
    %1350 = vmatpush1.msra.mxu0 0.0
    %1351 = vmatprep.subr.mxu0 0.0
    %1352 = vmatpush1.msra.mxu0 0.0
    %1353 = vmatprep.subr.mxu0 0.0
    %1354 = vmatpush1.msra.mxu0 0.0
    %1355 = vmatprep.subr.mxu0 0.0
    %1356 = vmatpush1.msra.mxu0 0.0
    %1357 = vmatprep.subr.mxu0 0.0
    %1358 = vmatpush1.msra.mxu0 0.0
    %1359 = vmatprep.subr.mxu0 0.0
    %1360 = vmatpush1.msra.mxu0 0.0
    %1361 = vmatprep.subr.mxu0 0.0
    %1362 = vmatpush1.msra.mxu0 0.0
    %1363 = vmatprep.subr.mxu0 0.0
    %1364 = vmatpush1.msra.mxu0 0.0
    %1365 = vmatprep.subr.mxu0 0.0
    %1366 = vmatpush1.msra.mxu0 0.0
    %1367 = vmatprep.subr.mxu0 0.0
    %1368 = vmatpush1.msra.mxu0 0.0
    %1369 = vmatprep.subr.mxu0 0.0
    %1370 = vmatpush1.msra.mxu0 0.0
    %1371 = vmatprep.subr.mxu0 0.0
    %1372 = vmatpush1.msra.mxu0 0.0
    %1373 = vmatprep.mubr.f32.mxu0 0.0
    %1374 = vmatmul.mubr.f32.gmra.mrb[0].mxu0 %v1307
    %v1375 = vpop.f32.mrb[0].mxu0
    %v1376 = vadd.f32 0.0, %v1375
    %v1377 = vpop.f32.mrb[0].mxu0
    %1378 = vdwg.mxu0
    %1379 = vrot.lane.b32.xlu0 %v207, 64
    %v1380 = vpop.permute.xlu0 %1379
    %v1383 = vsel %vm212, %v921, 0
    %1385 = vmatprep.subr.mxu0 0.0
    %1386 = vmatpush1.msra.mxu0 %v1380
    %1387 = vmatprep.subr.mxu0 0.0
    %1388 = vmatpush1.msra.mxu0 0.0
    %1389 = vmatprep.subr.mxu0 0.0
    %1390 = vmatpush1.msra.mxu0 0.0
    %1391 = vmatprep.subr.mxu0 0.0
    %1392 = vmatpush1.msra.mxu0 0.0
    %1393 = vmatprep.subr.mxu0 0.0
    %1394 = vmatpush1.msra.mxu0 0.0
    %1395 = vmatprep.subr.mxu0 0.0
    %1396 = vmatpush1.msra.mxu0 0.0
    %1397 = vmatprep.subr.mxu0 0.0
    %1398 = vmatpush1.msra.mxu0 0.0
    %1399 = vmatprep.subr.mxu0 0.0
    %1400 = vmatpush1.msra.mxu0 0.0
    %1401 = vmatprep.subr.mxu0 0.0
    %1402 = vmatpush1.msra.mxu0 0.0
    %1403 = vmatprep.subr.mxu0 0.0
    %1404 = vmatpush1.msra.mxu0 0.0
    %1405 = vmatprep.subr.mxu0 0.0
    %1406 = vmatpush1.msra.mxu0 0.0
    %1407 = vmatprep.subr.mxu0 0.0
    %1408 = vmatpush1.msra.mxu0 0.0
    %1409 = vmatprep.subr.mxu0 0.0
    %1410 = vmatpush1.msra.mxu0 0.0
    %1411 = vmatprep.subr.mxu0 0.0
    %1412 = vmatpush1.msra.mxu0 0.0
    %1413 = vmatprep.subr.mxu0 0.0
    %1414 = vmatpush1.msra.mxu0 0.0
    %1415 = vmatprep.subr.mxu0 0.0
    %1416 = vmatpush1.msra.mxu0 0.0
    %1417 = vmatprep.subr.mxu0 0.0
    %1418 = vmatpush1.msra.mxu0 0.0
    %1419 = vmatprep.subr.mxu0 0.0
    %1420 = vmatpush1.msra.mxu0 0.0
    %1421 = vmatprep.subr.mxu0 0.0
    %1422 = vmatpush1.msra.mxu0 0.0
    %1423 = vmatprep.subr.mxu0 0.0
    %1424 = vmatpush1.msra.mxu0 0.0
    %1425 = vmatprep.subr.mxu0 0.0
    %1426 = vmatpush1.msra.mxu0 0.0
    %1427 = vmatprep.subr.mxu0 0.0
    %1428 = vmatpush1.msra.mxu0 0.0
    %1429 = vmatprep.subr.mxu0 0.0
    %1430 = vmatpush1.msra.mxu0 0.0
    %1431 = vmatprep.subr.mxu0 0.0
    %1432 = vmatpush1.msra.mxu0 0.0
    %1433 = vmatprep.subr.mxu0 0.0
    %1434 = vmatpush1.msra.mxu0 0.0
    %1435 = vmatprep.subr.mxu0 0.0
    %1436 = vmatpush1.msra.mxu0 0.0
    %1437 = vmatprep.subr.mxu0 0.0
    %1438 = vmatpush1.msra.mxu0 0.0
    %1439 = vmatprep.subr.mxu0 0.0
    %1440 = vmatpush1.msra.mxu0 0.0
    %1441 = vmatprep.subr.mxu0 0.0
    %1442 = vmatpush1.msra.mxu0 0.0
    %1443 = vmatprep.subr.mxu0 0.0
    %1444 = vmatpush1.msra.mxu0 0.0
    %1445 = vmatprep.subr.mxu0 0.0
    %1446 = vmatpush1.msra.mxu0 0.0
    %1447 = vmatprep.subr.mxu0 0.0
    %1448 = vmatpush1.msra.mxu0 0.0
    %1449 = vmatprep.mubr.f32.mxu0 0.0
    %1450 = vmatmul.mubr.f32.gmra.mrb[0].mxu0 %v1383
    %v1451 = vpop.f32.mrb[0].mxu0
    %v1452 = vadd.f32 0.0, %v1451
    %v1453 = vpop.f32.mrb[0].mxu0
    %1454 = vdwg.mxu0
    %1455 = vrot.lane.b32.xlu0 %v209, 64
    %v1456 = vpop.permute.xlu0 %1455
    %v1459 = vsel %vm212, %v922, 0
    %1461 = vmatprep.subr.mxu0 0.0
    %1462 = vmatpush1.msra.mxu0 %v1456
    %1463 = vmatprep.subr.mxu0 0.0
    %1464 = vmatpush1.msra.mxu0 0.0
    %1465 = vmatprep.subr.mxu0 0.0
    %1466 = vmatpush1.msra.mxu0 0.0
    %1467 = vmatprep.subr.mxu0 0.0
    %1468 = vmatpush1.msra.mxu0 0.0
    %1469 = vmatprep.subr.mxu0 0.0
    %1470 = vmatpush1.msra.mxu0 0.0
    %1471 = vmatprep.subr.mxu0 0.0
    %1472 = vmatpush1.msra.mxu0 0.0
    %1473 = vmatprep.subr.mxu0 0.0
    %1474 = vmatpush1.msra.mxu0 0.0
    %1475 = vmatprep.subr.mxu0 0.0
    %1476 = vmatpush1.msra.mxu0 0.0
    %1477 = vmatprep.subr.mxu0 0.0
    %1478 = vmatpush1.msra.mxu0 0.0
    %1479 = vmatprep.subr.mxu0 0.0
    %1480 = vmatpush1.msra.mxu0 0.0
    %1481 = vmatprep.subr.mxu0 0.0
    %1482 = vmatpush1.msra.mxu0 0.0
    %1483 = vmatprep.subr.mxu0 0.0
    %1484 = vmatpush1.msra.mxu0 0.0
    %1485 = vmatprep.subr.mxu0 0.0
    %1486 = vmatpush1.msra.mxu0 0.0
    %1487 = vmatprep.subr.mxu0 0.0
    %1488 = vmatpush1.msra.mxu0 0.0
    %1489 = vmatprep.subr.mxu0 0.0
    %1490 = vmatpush1.msra.mxu0 0.0
    %1491 = vmatprep.subr.mxu0 0.0
    %1492 = vmatpush1.msra.mxu0 0.0
    %1493 = vmatprep.subr.mxu0 0.0
    %1494 = vmatpush1.msra.mxu0 0.0
    %1495 = vmatprep.subr.mxu0 0.0
    %1496 = vmatpush1.msra.mxu0 0.0
    %1497 = vmatprep.subr.mxu0 0.0
    %1498 = vmatpush1.msra.mxu0 0.0
    %1499 = vmatprep.subr.mxu0 0.0
    %1500 = vmatpush1.msra.mxu0 0.0
    %1501 = vmatprep.subr.mxu0 0.0
    %1502 = vmatpush1.msra.mxu0 0.0
    %1503 = vmatprep.subr.mxu0 0.0
    %1504 = vmatpush1.msra.mxu0 0.0
    %1505 = vmatprep.subr.mxu0 0.0
    %1506 = vmatpush1.msra.mxu0 0.0
    %1507 = vmatprep.subr.mxu0 0.0
    %1508 = vmatpush1.msra.mxu0 0.0
    %1509 = vmatprep.subr.mxu0 0.0
    %1510 = vmatpush1.msra.mxu0 0.0
    %1511 = vmatprep.subr.mxu0 0.0
    %1512 = vmatpush1.msra.mxu0 0.0
    %1513 = vmatprep.subr.mxu0 0.0
    %1514 = vmatpush1.msra.mxu0 0.0
    %1515 = vmatprep.subr.mxu0 0.0
    %1516 = vmatpush1.msra.mxu0 0.0
    %1517 = vmatprep.subr.mxu0 0.0
    %1518 = vmatpush1.msra.mxu0 0.0
    %1519 = vmatprep.subr.mxu0 0.0
    %1520 = vmatpush1.msra.mxu0 0.0
    %1521 = vmatprep.subr.mxu0 0.0
    %1522 = vmatpush1.msra.mxu0 0.0
    %1523 = vmatprep.subr.mxu0 0.0
    %1524 = vmatpush1.msra.mxu0 0.0
    %1525 = vmatprep.mubr.f32.mxu0 0.0
    %1526 = vmatmul.mubr.f32.gmra.mrb[0].mxu0 %v1459
    %v1527 = vpop.f32.mrb[0].mxu0
    %v1528 = vadd.f32 0.0, %v1527
    %v1529 = vpop.f32.mrb[0].mxu0
    %1530 = vdwg.mxu0
    %1532 = vrot.lane.b32.xlu0 %v1072, 8
    %v1533 = vpop.permute.xlu0 %1532
    %1536 = vrot.lane.b32.xlu0 %v1148, 16
    %v1537 = vpop.permute.xlu0 %1536
    %1540 = vrot.lane.b32.xlu0 %v1224, 24
    %v1541 = vpop.permute.xlu0 %1540
    %v1543 = vsel %vm212, %v996, %v1533
    %vm1544 = vcmask 130048
    %v1545 = vsel %vm1544, %v1543, %v1537
    %vm1546 = vcmask 195584
    %v1547 = vsel %vm1546, %v1545, %v1541
    %1549 = vrot.lane.b32.xlu0 %v1376, 8
    %v1550 = vpop.permute.xlu0 %1549
    %1553 = vrot.lane.b32.xlu0 %v1452, 16
    %v1554 = vpop.permute.xlu0 %1553
    %1557 = vrot.lane.b32.xlu0 %v1528, 24
    %v1558 = vpop.permute.xlu0 %1557
    %v1560 = vsel %vm212, %v1300, %v1550
    %v1561 = vsel %vm1544, %v1560, %v1554
    %v1562 = vsel %vm1546, %v1561, %v1558
    %v1563 = vld [vmem:[%s8] sm:$0xff]
    %v1564 = vld [vmem:[%s8 + $0x8] sm:$0xff]
    %v1565 = vld [vmem:[%s8 + $0x10] sm:$0xff]
    %v1566 = vld [vmem:[%s8 + $0x18] sm:$0xff]
    %v1567 = vld [vmem:[%s9] sm:$0x1]
    %v1569 = vlaneseq
    %v1570 = vshrl.u32 %v1569, 7
    %v1571 = vsub.s32 0, %v1570
    %v1572 = vrot.slane %v1567, %v1571
    %v1575 = vsel %vm60, %v1547, 0
    %v1578 = vsel %vm60, %v1562, 0
    %1580 = vmatprep.subr.mxu0 0.0
    %1581 = vmatpush1.msra.mxu0 %v1563
    %1582 = vmatprep.subr.mxu0 0.0
    %1583 = vmatpush1.msra.mxu0 %v1564
    %1584 = vmatprep.subr.mxu0 0.0
    %1585 = vmatpush1.msra.mxu0 %v1565
    %1586 = vmatprep.subr.mxu0 0.0
    %1587 = vmatpush1.msra.mxu0 %v1566
    %1588 = vmatprep.subr.mxu0 0.0
    %1589 = vmatpush1.msra.mxu0 0.0
    %1590 = vmatprep.subr.mxu0 0.0
    %1591 = vmatpush1.msra.mxu0 0.0
    %1592 = vmatprep.subr.mxu0 0.0
    %1593 = vmatpush1.msra.mxu0 0.0
    %1594 = vmatprep.subr.mxu0 0.0
    %1595 = vmatpush1.msra.mxu0 0.0
    %1596 = vmatprep.subr.mxu0 0.0
    %1597 = vmatpush1.msra.mxu0 0.0
    %1598 = vmatprep.subr.mxu0 0.0
    %1599 = vmatpush1.msra.mxu0 0.0
    %1600 = vmatprep.subr.mxu0 0.0
    %1601 = vmatpush1.msra.mxu0 0.0
    %1602 = vmatprep.subr.mxu0 0.0
    %1603 = vmatpush1.msra.mxu0 0.0
    %1604 = vmatprep.subr.mxu0 0.0
    %1605 = vmatpush1.msra.mxu0 0.0
    %1606 = vmatprep.subr.mxu0 0.0
    %1607 = vmatpush1.msra.mxu0 0.0
    %1608 = vmatprep.subr.mxu0 0.0
    %1609 = vmatpush1.msra.mxu0 0.0
    %1610 = vmatprep.subr.mxu0 0.0
    %1611 = vmatpush1.msra.mxu0 0.0
    %1612 = vmatprep.subr.mxu0 0.0
    %1613 = vmatpush1.msra.mxu0 0.0
    %1614 = vmatprep.subr.mxu0 0.0
    %1615 = vmatpush1.msra.mxu0 0.0
    %1616 = vmatprep.subr.mxu0 0.0
    %1617 = vmatpush1.msra.mxu0 0.0
    %1618 = vmatprep.subr.mxu0 0.0
    %1619 = vmatpush1.msra.mxu0 0.0
    %1620 = vmatprep.subr.mxu0 0.0
    %1621 = vmatpush1.msra.mxu0 0.0
    %1622 = vmatprep.subr.mxu0 0.0
    %1623 = vmatpush1.msra.mxu0 0.0
    %1624 = vmatprep.subr.mxu0 0.0
    %1625 = vmatpush1.msra.mxu0 0.0
    %1626 = vmatprep.subr.mxu0 0.0
    %1627 = vmatpush1.msra.mxu0 0.0
    %1628 = vmatprep.subr.mxu0 0.0
    %1629 = vmatpush1.msra.mxu0 0.0
    %1630 = vmatprep.subr.mxu0 0.0
    %1631 = vmatpush1.msra.mxu0 0.0
    %1632 = vmatprep.subr.mxu0 0.0
    %1633 = vmatpush1.msra.mxu0 0.0
    %1634 = vmatprep.subr.mxu0 0.0
    %1635 = vmatpush1.msra.mxu0 0.0
    %1636 = vmatprep.subr.mxu0 0.0
    %1637 = vmatpush1.msra.mxu0 0.0
    %1638 = vmatprep.subr.mxu0 0.0
    %1639 = vmatpush1.msra.mxu0 0.0
    %1640 = vmatprep.subr.mxu0 0.0
    %1641 = vmatpush1.msra.mxu0 0.0
    %1642 = vmatprep.subr.mxu0 0.0
    %1643 = vmatpush1.msra.mxu0 0.0
    %1644 = vmatprep.mubr.f32.mxu0 0.0
    %1645 = vmatmul.mubr.f32.gmra.mrb[0].mxu0 %v1575
    %v1646 = vpop.f32.mrb[0].mxu0
    %v1647 = vadd.f32 %v1572, %v1646
    %v1648 = vpop.f32.mrb[0].mxu0
    %1649 = vmatprep.mubr.f32.mxu0 0.0
    %1650 = vmatmul.mubr.f32.gmra.mrb[0].mxu0 %v1578
    %v1651 = vpop.f32.mrb[0].mxu0
    %v1652 = vadd.f32 %v1572, %v1651
    %v1653 = vpop.f32.mrb[0].mxu0
    %1654 = vdwg.mxu0
    %v1655 = vadd.f32 %v1647, %v48
    %v1656 = vadd.f32 %v1652, %v49
    %v1657 = vld [vmem:[%s4] sm:$0x1]
    %v1658 = vld [vmem:[%s5] sm:$0x1]
    %v1659 = vsel %vm60, %v1655, 0.0
    %1660 = vadd.xlane.f32.xlu0 %v1659
    %v1661 = vpop.xlane.xlu0 %1660
    %v1662 = vsel %vm60, %v1656, 0.0
    %1663 = vadd.xlane.f32.xlu0 %v1662
    %v1664 = vpop.xlane.xlu0 %1663
    %v1665 = vmul.f32 %v1661, %v67
    %v1666 = vmul.f32 %v1664, %v67
    %v1667 = vsub.f32 %v1655, %v1665
    %v1668 = vsub.f32 %v1656, %v1666
    %v1669 = vmul.f32 %v1667, %v1667
    %v1670 = vmul.f32 %v1668, %v1668
    %v1671 = vsel %vm60, %v1669, 0.0
    %1672 = vadd.xlane.f32.xlu0 %v1671
    %v1673 = vpop.xlane.xlu0 %1672
    %v1674 = vsel %vm60, %v1670, 0.0
    %1675 = vadd.xlane.f32.xlu0 %v1674
    %v1676 = vpop.xlane.xlu0 %1675
    %v1677 = vmul.f32 %v1673, %v67
    %v1678 = vmul.f32 %v1676, %v67
    %v1679 = vadd.f32 %v1677, 1e-05
    %v1680 = vadd.f32 %v1678, 1e-05
    %v1681 = vrsqrt.pop %v1679
    %v1682 = vrsqrt.pop %v1680
    %v1683 = vmul.f32 %v1667, %v1681
    %v1684 = vmul.f32 %v1668, %v1682
    %v1686 = vlaneseq
    %v1687 = vshrl.u32 %v1686, 7
    %v1688 = vsub.s32 0, %v1687
    %v1689 = vrot.slane %v1657, %v1688
    %v1691 = vmul.f32 %v1683, %v1689
    %v1692 = vmul.f32 %v1684, %v1689
    %v1694 = vlaneseq
    %v1695 = vshrl.u32 %v1694, 7
    %v1696 = vsub.s32 0, %v1695
    %v1697 = vrot.slane %v1658, %v1696
    %v1699 = vadd.f32 %v1691, %v1697
    %v1700 = vadd.f32 %v1692, %v1697
    %v1701 = vld [vmem:[%s10] sm:$0xff]
    %v1702 = vld [vmem:[%s10 + $0x8] sm:$0xff]
    %v1703 = vld [vmem:[%s10 + $0x10] sm:$0xff]
    %v1704 = vld [vmem:[%s10 + $0x18] sm:$0xff]
    %v1705 = vld [vmem:[%s11] sm:$0x1]
    %v1707 = vlaneseq
    %v1708 = vshrl.u32 %v1707, 7
    %v1709 = vsub.s32 0, %v1708
    %v1710 = vrot.slane %v1705, %v1709
    %v1713 = vsel %vm60, %v1699, 0
    %v1716 = vsel %vm60, %v1700, 0
    %1718 = vmatprep.subr.mxu0 0.0
    %1719 = vmatpush1.msra.mxu0 %v1701
    %1720 = vmatprep.subr.mxu0 0.0
    %1721 = vmatpush1.msra.mxu0 %v1702
    %1722 = vmatprep.subr.mxu0 0.0
    %1723 = vmatpush1.msra.mxu0 %v1703
    %1724 = vmatprep.subr.mxu0 0.0
    %1725 = vmatpush1.msra.mxu0 %v1704
    %1726 = vmatprep.subr.mxu0 0.0
    %1727 = vmatpush1.msra.mxu0 0.0
    %1728 = vmatprep.subr.mxu0 0.0
    %1729 = vmatpush1.msra.mxu0 0.0
    %1730 = vmatprep.subr.mxu0 0.0
    %1731 = vmatpush1.msra.mxu0 0.0
    %1732 = vmatprep.subr.mxu0 0.0
    %1733 = vmatpush1.msra.mxu0 0.0
    %1734 = vmatprep.subr.mxu0 0.0
    %1735 = vmatpush1.msra.mxu0 0.0
    %1736 = vmatprep.subr.mxu0 0.0
    %1737 = vmatpush1.msra.mxu0 0.0
    %1738 = vmatprep.subr.mxu0 0.0
    %1739 = vmatpush1.msra.mxu0 0.0
    %1740 = vmatprep.subr.mxu0 0.0
    %1741 = vmatpush1.msra.mxu0 0.0
    %1742 = vmatprep.subr.mxu0 0.0
    %1743 = vmatpush1.msra.mxu0 0.0
    %1744 = vmatprep.subr.mxu0 0.0
    %1745 = vmatpush1.msra.mxu0 0.0
    %1746 = vmatprep.subr.mxu0 0.0
    %1747 = vmatpush1.msra.mxu0 0.0
    %1748 = vmatprep.subr.mxu0 0.0
    %1749 = vmatpush1.msra.mxu0 0.0
    %1750 = vmatprep.subr.mxu0 0.0
    %1751 = vmatpush1.msra.mxu0 0.0
    %1752 = vmatprep.subr.mxu0 0.0
    %1753 = vmatpush1.msra.mxu0 0.0
    %1754 = vmatprep.subr.mxu0 0.0
    %1755 = vmatpush1.msra.mxu0 0.0
    %1756 = vmatprep.subr.mxu0 0.0
    %1757 = vmatpush1.msra.mxu0 0.0
    %1758 = vmatprep.subr.mxu0 0.0
    %1759 = vmatpush1.msra.mxu0 0.0
    %1760 = vmatprep.subr.mxu0 0.0
    %1761 = vmatpush1.msra.mxu0 0.0
    %1762 = vmatprep.subr.mxu0 0.0
    %1763 = vmatpush1.msra.mxu0 0.0
    %1764 = vmatprep.subr.mxu0 0.0
    %1765 = vmatpush1.msra.mxu0 0.0
    %1766 = vmatprep.subr.mxu0 0.0
    %1767 = vmatpush1.msra.mxu0 0.0
    %1768 = vmatprep.subr.mxu0 0.0
    %1769 = vmatpush1.msra.mxu0 0.0
    %1770 = vmatprep.subr.mxu0 0.0
    %1771 = vmatpush1.msra.mxu0 0.0
    %1772 = vmatprep.subr.mxu0 0.0
    %1773 = vmatpush1.msra.mxu0 0.0
    %1774 = vmatprep.subr.mxu0 0.0
    %1775 = vmatpush1.msra.mxu0 0.0
    %1776 = vmatprep.subr.mxu0 0.0
    %1777 = vmatpush1.msra.mxu0 0.0
    %1778 = vmatprep.subr.mxu0 0.0
    %1779 = vmatpush1.msra.mxu0 0.0
    %1780 = vmatprep.subr.mxu0 0.0
    %1781 = vmatpush1.msra.mxu0 0.0
    %1782 = vmatprep.mubr.f32.mxu0 0.0
    %1783 = vmatmul.mubr.f32.gmra.mrb[0].mxu0 %v1713
    %v1784 = vpop.f32.mrb[0].mxu0
    %v1785 = vadd.f32 %v1710, %v1784
    %v1786 = vpop.f32.mrb[0].mxu0
    %1787 = vmatprep.mubr.f32.mxu0 0.0
    %1788 = vmatmul.mubr.f32.gmra.mrb[0].mxu0 %v1716
    %v1789 = vpop.f32.mrb[0].mxu0
    %v1790 = vadd.f32 %v1710, %v1789
    %v1791 = vpop.f32.mrb[0].mxu0
    %1792 = vdwg.mxu0
    %v1793 = vmul.f32 %v1785, 0.5
    %v1794 = vmul.f32 %v1790, 0.5
    %v1795 = vmul.f32 %v1785, 0.7978846
    %v1796 = vmul.f32 %v1790, 0.7978846
    %v1797 = vmul.f32 %v1785, 0.044715
    %v1798 = vmul.f32 %v1790, 0.044715
    %v1799 = vmul.f32 %v1797, %v1785
    %v1800 = vmul.f32 %v1798, %v1790
    %v1801 = vadd.f32 %v1799, 1.0
    %v1802 = vadd.f32 %v1800, 1.0
    %v1803 = vmul.f32 %v1795, %v1801
    %v1804 = vmul.f32 %v1796, %v1802
    %v1805 = vtanh.pop %v1803
    %v1806 = vtanh.pop %v1804
    %v1807 = vadd.f32 %v1805, 1.0
    %v1808 = vadd.f32 %v1806, 1.0
    %v1809 = vmul.f32 %v1793, %v1807
    %v1810 = vmul.f32 %v1794, %v1808
    %v1811 = vld [vmem:[%s12] sm:$0xff]
    %v1812 = vld [vmem:[%s12 + $0x8] sm:$0xff]
    %v1813 = vld [vmem:[%s12 + $0x10] sm:$0xff]
    %v1814 = vld [vmem:[%s12 + $0x18] sm:$0xff]
    %v1815 = vld [vmem:[%s12 + $0x20] sm:$0xff]
    %v1816 = vld [vmem:[%s12 + $0x28] sm:$0xff]
    %v1817 = vld [vmem:[%s12 + $0x30] sm:$0xff]
    %v1818 = vld [vmem:[%s12 + $0x38] sm:$0xff]
    %v1819 = vld [vmem:[%s12 + $0x40] sm:$0xff]
    %v1820 = vld [vmem:[%s12 + $0x48] sm:$0xff]
    %v1821 = vld [vmem:[%s12 + $0x50] sm:$0xff]
    %v1822 = vld [vmem:[%s12 + $0x58] sm:$0xff]
    %v1823 = vld [vmem:[%s12 + $0x60] sm:$0xff]
    %v1824 = vld [vmem:[%s12 + $0x68] sm:$0xff]
    %v1825 = vld [vmem:[%s12 + $0x70] sm:$0xff]
    %v1826 = vld [vmem:[%s12 + $0x78] sm:$0xff]
    %v1827 = vld [vmem:[%s13] sm:$0x1]
    %v1829 = vlaneseq
    %v1830 = vshrl.u32 %v1829, 7
    %v1831 = vsub.s32 0, %v1830
    %v1832 = vrot.slane %v1827, %v1831
    %1834 = vmatprep.subr.mxu0 0.0
    %1835 = vmatpush1.msra.mxu0 %v1811
    %1836 = vmatprep.subr.mxu0 0.0
    %1837 = vmatpush1.msra.mxu0 %v1812
    %1838 = vmatprep.subr.mxu0 0.0
    %1839 = vmatpush1.msra.mxu0 %v1813
    %1840 = vmatprep.subr.mxu0 0.0
    %1841 = vmatpush1.msra.mxu0 %v1814
    %1842 = vmatprep.subr.mxu0 0.0
    %1843 = vmatpush1.msra.mxu0 %v1815
    %1844 = vmatprep.subr.mxu0 0.0
    %1845 = vmatpush1.msra.mxu0 %v1816
    %1846 = vmatprep.subr.mxu0 0.0
    %1847 = vmatpush1.msra.mxu0 %v1817
    %1848 = vmatprep.subr.mxu0 0.0
    %1849 = vmatpush1.msra.mxu0 %v1818
    %1850 = vmatprep.subr.mxu0 0.0
    %1851 = vmatpush1.msra.mxu0 %v1819
    %1852 = vmatprep.subr.mxu0 0.0
    %1853 = vmatpush1.msra.mxu0 %v1820
    %1854 = vmatprep.subr.mxu0 0.0
    %1855 = vmatpush1.msra.mxu0 %v1821
    %1856 = vmatprep.subr.mxu0 0.0
    %1857 = vmatpush1.msra.mxu0 %v1822
    %1858 = vmatprep.subr.mxu0 0.0
    %1859 = vmatpush1.msra.mxu0 %v1823
    %1860 = vmatprep.subr.mxu0 0.0
    %1861 = vmatpush1.msra.mxu0 %v1824
    %1862 = vmatprep.subr.mxu0 0.0
    %1863 = vmatpush1.msra.mxu0 %v1825
    %1864 = vmatprep.subr.mxu0 0.0
    %1865 = vmatpush1.msra.mxu0 %v1826
    %1866 = vmatprep.subr.mxu0 0.0
    %1867 = vmatpush1.msra.mxu0 0.0
    %1868 = vmatprep.subr.mxu0 0.0
    %1869 = vmatpush1.msra.mxu0 0.0
    %1870 = vmatprep.subr.mxu0 0.0
    %1871 = vmatpush1.msra.mxu0 0.0
    %1872 = vmatprep.subr.mxu0 0.0
    %1873 = vmatpush1.msra.mxu0 0.0
    %1874 = vmatprep.subr.mxu0 0.0
    %1875 = vmatpush1.msra.mxu0 0.0
    %1876 = vmatprep.subr.mxu0 0.0
    %1877 = vmatpush1.msra.mxu0 0.0
    %1878 = vmatprep.subr.mxu0 0.0
    %1879 = vmatpush1.msra.mxu0 0.0
    %1880 = vmatprep.subr.mxu0 0.0
    %1881 = vmatpush1.msra.mxu0 0.0
    %1882 = vmatprep.subr.mxu0 0.0
    %1883 = vmatpush1.msra.mxu0 0.0
    %1884 = vmatprep.subr.mxu0 0.0
    %1885 = vmatpush1.msra.mxu0 0.0
    %1886 = vmatprep.subr.mxu0 0.0
    %1887 = vmatpush1.msra.mxu0 0.0
    %1888 = vmatprep.subr.mxu0 0.0
    %1889 = vmatpush1.msra.mxu0 0.0
    %1890 = vmatprep.subr.mxu0 0.0
    %1891 = vmatpush1.msra.mxu0 0.0
    %1892 = vmatprep.subr.mxu0 0.0
    %1893 = vmatpush1.msra.mxu0 0.0
    %1894 = vmatprep.subr.mxu0 0.0
    %1895 = vmatpush1.msra.mxu0 0.0
    %1896 = vmatprep.subr.mxu0 0.0
    %1897 = vmatpush1.msra.mxu0 0.0
    %1898 = vmatprep.mubr.f32.mxu0 0.0
    %1899 = vmatmul.mubr.f32.gmra.mrb[0].mxu0 %v1809
    %v1900 = vpop.f32.mrb[0].mxu0
    %v1901 = vadd.f32 %v1832, %v1900
    %v1902 = vpop.f32.mrb[0].mxu0
    %1903 = vmatprep.mubr.f32.mxu0 0.0
    %1904 = vmatmul.mubr.f32.gmra.mrb[0].mxu0 %v1810
    %v1905 = vpop.f32.mrb[0].mxu0
    %v1906 = vadd.f32 %v1832, %v1905
    %v1907 = vpop.f32.mrb[0].mxu0
    %1908 = vdwg.mxu0
    %v1909 = vadd.f32 %v1901, %v1655
    %v1910 = vadd.f32 %v1906, %v1656
    %1911 = vst.msk [vmem:[#allocation2] sm:$0xff] %vm60, %v1909
    %1912 = vst.msk [vmem:[#allocation2 + $0x8] sm:$0xff] %vm60, %v1910
    // Predicated region
    $region58: #{tt_bloom_block.1} parent=1 // pred_check
      _
    $region59: #{tt_bloom_block.1} parent=1 // pred_check_branch
      %1914 = sbr.rel (0) target = $region61
    $region60: #{tt_bloom_block.1} parent=1 // pred_region
      %s1916 = ssub.s32 256, 256
      %1917 = vsyncadd [#allocation3], %s1916
      %s1918 = sshll.u32 [#allocation2], 4
      %s1919 = int_to_ptr.vmem [resolvable:$true] %s1918
      %1924 = dma.vmem_to_hbm [thread:$0]  %s1919, 256, %s14, [#allocation3], 128, 128, 8
    $region61: #{tt_bloom_block.1} parent=1 // pred_fallthru
      _
    // Predicated region
    $region62: #{tt_bloom_block.1} parent=1 // pred_check
      _
    $region63: #{tt_bloom_block.1} parent=1 // pred_check_branch
      %1926 = sbr.rel (0) target = $region65
    $region64: #{tt_bloom_block.1} parent=1 // pred_region
      %1927 = dma.done [#allocation3], 256
    $region65: #{tt_bloom_block.1} parent=1 // pred_fallthru
      _
    %1928 = vsyncpa [#allocation3], 1

</llo_original>
